<compile_context>
chip_gen: v7x
topology: tpu7x:2x2x1
jax: 0.10.0
libtpu: 0.0.40
codegen_flags: <defaults>
</compile_context>

<pallas_src>
import jax
import jax.numpy as jnp
from jax.experimental import pallas as pl
from jax.experimental.pallas import tpu as pltpu


def _leaky_relu(x, slope=0.2):
    return jnp.where(x > 0, x, slope * x)


def quality_filter_kernel(x_ref,
                          w1_ref, b1_ref,
                          w2_ref, b2_ref,
                          w3_ref, b3_ref,
                          w4_ref, b4_ref,
                          o_ref):
    # x_ref: (in, batch_tile) bf16; w_i: (out_i, in_i) bf16; b_i: (out_i, 1) f32.
    # Layers 1-3: bf16 MXU matmuls, f32 accumulation; f32 elementwise tail
    # (v5e-safe), then pack to bf16 right away for the next dot.
    h = jnp.dot(w1_ref[...], x_ref[...],
                preferred_element_type=jnp.float32) + b1_ref[...]
    h = _leaky_relu(h).astype(jnp.bfloat16)

    h = jnp.dot(w2_ref[...], h,
                preferred_element_type=jnp.float32) + b2_ref[...]
    h = _leaky_relu(h).astype(jnp.bfloat16)

    h = jnp.dot(w3_ref[...], h,
                preferred_element_type=jnp.float32) + b3_ref[...]
    h = _leaky_relu(h).astype(jnp.bfloat16)

    # Layer 4: lane-dense MXU matmul, no transpose.  (1, 8*in) @ (8*in, batch_tile)
    # -> (1, batch_tile) f32, scalar bias from SMEM, sigmoid on the EUP.
    y = jnp.dot(w4_ref[...], h, preferred_element_type=jnp.float32)
    o_ref[...] = jax.nn.sigmoid(y + b4_ref[0])


def _pick_batch_tile(B):
    # Single maximal tile on single-TC parts (v5e/v6e): each grid step costs
    # ~0.35 us of fixed overhead that dwarfs the matmul work at this size.
    # Once B >= 512, split into exactly two steps so both v7x TensorCores get one
    # maximal step each (batch_tile must stay a multiple of 128 for lane-dense IO).
    if B >= 512 and B % 256 == 0:
        return B // 2
    return B


def _rep_spec(arr):
    # Full-array block, same block every grid step (grid-invariant resident weight).
    n = arr.ndim
    return pl.BlockSpec(arr.shape, lambda i: (0,) * n)


def quality_filter_forward(x, params, *, batch_tile=None):
    """x: (B, input_size), preferably bf16 (the producer contract).
    params: native-layout weights (out, in) in bf16, biases (out, 1) f32,
    b4 as an f32 scalar of shape (1,)."""
    B, in_features = x.shape
    if x.dtype != jnp.bfloat16:
        # Fallback only: preferred contract is a bf16 producer (halves x's HBM
        # traffic); this cast is a no-op when the caller already hands bf16.
        x = x.astype(jnp.bfloat16)
    if batch_tile is None:
        batch_tile = _pick_batch_tile(B)
    assert B % batch_tile == 0
    num_tiles = B // batch_tile

    w1, b1 = params["w1"], params["b1"]
    w2, b2 = params["w2"], params["b2"]
    w3, b3 = params["w3"], params["b3"]
    w4, b4 = params["w4"], params["b4"]
    out_size = w4.shape[0]
    # TODO(synk): generalize the lane-dense head + SMEM bias to output_size > 1
    # (out block becomes (out_size, batch_tile) and b4 a (out_size,1) VMEM column).
    assert out_size == 1, "kernel head is specialized for output_size == 1"

    # Flipped layout: features on sublanes, batch on lanes (pure layout plumbing).
    xt = x.T                                   # (in_features, B) bf16

    in_specs = [
        pl.BlockSpec((in_features, batch_tile), lambda i: (0, i)),
        _rep_spec(w1), _rep_spec(b1),
        _rep_spec(w2), _rep_spec(b2),
        _rep_spec(w3), _rep_spec(b3),
        _rep_spec(w4),
        pl.BlockSpec(memory_space=pltpu.MemorySpace.SMEM),   # b4 scalar
    ]
    # Lane-dense output: one full (1, batch_tile) row per step into a (1, B) buffer.
    out_specs = pl.BlockSpec((1, batch_tile), lambda i: (0, i))

    out_row = pl.pallas_call(
        quality_filter_kernel,
        out_shape=jax.ShapeDtypeStruct((1, B), jnp.float32),
        grid_spec=pltpu.PrefetchScalarGridSpec(
            num_scalar_prefetch=0,
            grid=(num_tiles,),
            in_specs=in_specs,
            out_specs=out_specs,
        ),
        compiler_params=pltpu.CompilerParams(
            dimension_semantics=("parallel",),
        ),
    )(xt, w1, b1, w2, b2, w3, b3, w4, b4)

    return out_row.reshape(B, out_size)


def init_params(key, input_size, output_size=1):
    """Deterministic init mirroring nn.Linear (W: (out,in), b: (out,)), kept in the
    NATIVE (out, in) layout (no transpose anywhere).  Weights in bf16 (MXU path),
    biases in f32: layers 1-3 as (out,1) columns, b4 as a scalar (1,) for SMEM."""
    dims = [(input_size, input_size * 2),
            (input_size * 2, input_size * 4),
            (input_size * 4, input_size * 8),
            (input_size * 8, output_size)]
    params = {}
    keys = jax.random.split(key, 2 * len(dims))
    for idx, (fan_in, fan_out) in enumerate(dims):
        bound = 1.0 / jnp.sqrt(fan_in)
        w = jax.random.uniform(keys[2 * idx], (fan_out, fan_in),
                               minval=-bound, maxval=bound, dtype=jnp.float32)
        b = jax.random.uniform(keys[2 * idx + 1], (fan_out,),
                               minval=-bound, maxval=bound, dtype=jnp.float32)
        params[f"w{idx + 1}"] = w.astype(jnp.bfloat16)        # (out, in) bf16
        if idx < 3:
            params[f"b{idx + 1}"] = b.reshape(fan_out, 1).astype(jnp.float32)
        else:
            params[f"b{idx + 1}"] = b.astype(jnp.float32)     # (1,) SMEM scalar
    return params


def reference_forward(x, params):
    """Pure-JAX reference in the standard (batch, features) layout, mirroring the
    kernel precision (bf16 matmuls, f32 accumulation and elementwise tail)."""
    h = x.astype(jnp.bfloat16)
    for i in (1, 2, 3):
        h = jnp.dot(h, params[f"w{i}"].T,
                    preferred_element_type=jnp.float32) + params[f"b{i}"].T
        h = jnp.where(h > 0, h, 0.2 * h).astype(jnp.bfloat16)
    y = jnp.dot(h, params["w4"].T,
                preferred_element_type=jnp.float32) + params["b4"]
    return jax.nn.sigmoid(y)


if __name__ == "__main__":
    INPUT_SIZE = 32      # hidden widths: 64, 128, 256
    BATCH = 256          # -> single maximal tile, grid=(1,)

    key = jax.random.PRNGKey(0)
    k_x, k_p = jax.random.split(key)
    # Producer contract: x arrives in bf16 (x is ~all of the per-step HBM traffic).
    x = jax.random.normal(k_x, (BATCH, INPUT_SIZE), dtype=jnp.bfloat16)
    params = init_params(k_p, INPUT_SIZE, output_size=1)

    out = jax.block_until_ready(quality_filter_forward(x, params))
    ref = reference_forward(x, params)

    assert out.shape == (BATCH, 1) and out.dtype == jnp.float32
    # NOTE: this checks consistency against a precision-matched (bf16-matmul)
    # reference, not against an end-to-end f32 PyTorch run.
    err = float(jnp.max(jnp.abs(out - ref)))
    assert err < 1e-3, err
    print("KERNEL_OK")
</pallas_src>

<mosaic_0001>
module attributes {stable_mosaic.version = 11 : i64} {
  func.func @quality_filter_kernel(%arg0: i32, %arg1: memref<32x256xbf16, #tpu.memory_space<vmem>>, %arg2: memref<64x32xbf16, #tpu.memory_space<vmem>>, %arg3: memref<64x1xf32, #tpu.memory_space<vmem>>, %arg4: memref<128x64xbf16, #tpu.memory_space<vmem>>, %arg5: memref<128x1xf32, #tpu.memory_space<vmem>>, %arg6: memref<256x128xbf16, #tpu.memory_space<vmem>>, %arg7: memref<256x1xf32, #tpu.memory_space<vmem>>, %arg8: memref<1x256xbf16, #tpu.memory_space<vmem>>, %arg9: memref<1xf32, #tpu.memory_space<smem>>, %arg10: memref<1x256xf32, #tpu.memory_space<vmem>>) attributes {dimension_semantics = [#tpu.dimension_semantics<parallel>], iteration_bounds = array<i64: 1>, scalar_prefetch = 0 : i64, scratch_operands = 0 : i64, tpu.core_type = #tpu.core_type<tc>, window_params = [{transform_indices = @transform_0, window_bounds = array<i64: 32, 256>}, {pipeline_mode = #tpu.pipeline_mode<synchronous>, transform_indices = @transform_1, window_bounds = array<i64: 64, 32>}, {pipeline_mode = #tpu.pipeline_mode<synchronous>, transform_indices = @transform_2, window_bounds = array<i64: 64, 1>}, {pipeline_mode = #tpu.pipeline_mode<synchronous>, transform_indices = @transform_3, window_bounds = array<i64: 128, 64>}, {pipeline_mode = #tpu.pipeline_mode<synchronous>, transform_indices = @transform_4, window_bounds = array<i64: 128, 1>}, {pipeline_mode = #tpu.pipeline_mode<synchronous>, transform_indices = @transform_5, window_bounds = array<i64: 256, 128>}, {pipeline_mode = #tpu.pipeline_mode<synchronous>, transform_indices = @transform_6, window_bounds = array<i64: 256, 1>}, {pipeline_mode = #tpu.pipeline_mode<synchronous>, transform_indices = @transform_7, window_bounds = array<i64: 1, 256>}, {transform_indices = @transform_8, window_bounds = array<i64: 1>}, {transform_indices = @transform_9, window_bounds = array<i64: 1, 256>}]} {
    %c0 = arith.constant 0 : index
    %c0_0 = arith.constant 0 : index
    %0 = vector.load %arg2[%c0, %c0_0] : memref<64x32xbf16, #tpu.memory_space<vmem>>, vector<64x32xbf16>
    %c0_1 = arith.constant 0 : index
    %c0_2 = arith.constant 0 : index
    %1 = vector.load %arg1[%c0_1, %c0_2] : memref<32x256xbf16, #tpu.memory_space<vmem>>, vector<32x256xbf16>
    %cst = arith.constant dense<0.000000e+00> : vector<64x256xf32>
    %2 = tpu.matmul %0, %1, %cst {dimension_numbers = #tpu.dot_dimension_numbers<[1], [0], [0], [1], [0, 0, 1, 1], [], []>} : vector<64x32xbf16>, vector<32x256xbf16>, vector<64x256xf32> -> vector<64x256xf32>
    %c0_3 = arith.constant 0 : index
    %c0_4 = arith.constant 0 : index
    %3 = vector.load %arg3[%c0_3, %c0_4] : memref<64x1xf32, #tpu.memory_space<vmem>>, vector<64x1xf32>
    %4 = vector.broadcast %3 : vector<64x1xf32> to vector<64x256xf32>
    %5 = arith.addf %2, %4 : vector<64x256xf32>
    %cst_5 = arith.constant 0.000000e+00 : f32
    %6 = vector.broadcast %cst_5 : f32 to vector<64x256xf32>
    %7 = arith.cmpf ogt, %5, %6 : vector<64x256xf32>
    %cst_6 = arith.constant 2.000000e-01 : f32
    %8 = vector.broadcast %cst_6 : f32 to vector<64x256xf32>
    %9 = arith.mulf %8, %5 : vector<64x256xf32>
    %10 = arith.select %7, %5, %9 : vector<64x256xi1>, vector<64x256xf32>
    %11 = arith.truncf %10 : vector<64x256xf32> to vector<64x256xbf16>
    %c0_7 = arith.constant 0 : index
    %c0_8 = arith.constant 0 : index
    %12 = vector.load %arg4[%c0_7, %c0_8] : memref<128x64xbf16, #tpu.memory_space<vmem>>, vector<128x64xbf16>
    %cst_9 = arith.constant dense<0.000000e+00> : vector<128x256xf32>
    %13 = tpu.matmul %12, %11, %cst_9 {dimension_numbers = #tpu.dot_dimension_numbers<[1], [0], [0], [1], [0, 0, 1, 1], [], []>} : vector<128x64xbf16>, vector<64x256xbf16>, vector<128x256xf32> -> vector<128x256xf32>
    %c0_10 = arith.constant 0 : index
    %c0_11 = arith.constant 0 : index
    %14 = vector.load %arg5[%c0_10, %c0_11] : memref<128x1xf32, #tpu.memory_space<vmem>>, vector<128x1xf32>
    %15 = vector.broadcast %14 : vector<128x1xf32> to vector<128x256xf32>
    %16 = arith.addf %13, %15 : vector<128x256xf32>
    %cst_12 = arith.constant 0.000000e+00 : f32
    %17 = vector.broadcast %cst_12 : f32 to vector<128x256xf32>
    %18 = arith.cmpf ogt, %16, %17 : vector<128x256xf32>
    %cst_13 = arith.constant 2.000000e-01 : f32
    %19 = vector.broadcast %cst_13 : f32 to vector<128x256xf32>
    %20 = arith.mulf %19, %16 : vector<128x256xf32>
    %21 = arith.select %18, %16, %20 : vector<128x256xi1>, vector<128x256xf32>
    %22 = arith.truncf %21 : vector<128x256xf32> to vector<128x256xbf16>
    %c0_14 = arith.constant 0 : index
    %c0_15 = arith.constant 0 : index
    %23 = vector.load %arg6[%c0_14, %c0_15] : memref<256x128xbf16, #tpu.memory_space<vmem>>, vector<256x128xbf16>
    %cst_16 = arith.constant dense<0.000000e+00> : vector<256x256xf32>
    %24 = tpu.matmul %23, %22, %cst_16 {dimension_numbers = #tpu.dot_dimension_numbers<[1], [0], [0], [1], [0, 0, 1, 1], [], []>} : vector<256x128xbf16>, vector<128x256xbf16>, vector<256x256xf32> -> vector<256x256xf32>
    %c0_17 = arith.constant 0 : index
    %c0_18 = arith.constant 0 : index
    %25 = vector.load %arg7[%c0_17, %c0_18] : memref<256x1xf32, #tpu.memory_space<vmem>>, vector<256x1xf32>
    %26 = vector.broadcast %25 : vector<256x1xf32> to vector<256x256xf32>
    %27 = arith.addf %24, %26 : vector<256x256xf32>
    %cst_19 = arith.constant 0.000000e+00 : f32
    %28 = vector.broadcast %cst_19 : f32 to vector<256x256xf32>
    %29 = arith.cmpf ogt, %27, %28 : vector<256x256xf32>
    %cst_20 = arith.constant 2.000000e-01 : f32
    %30 = vector.broadcast %cst_20 : f32 to vector<256x256xf32>
    %31 = arith.mulf %30, %27 : vector<256x256xf32>
    %32 = arith.select %29, %27, %31 : vector<256x256xi1>, vector<256x256xf32>
    %33 = arith.truncf %32 : vector<256x256xf32> to vector<256x256xbf16>
    %c0_21 = arith.constant 0 : index
    %c0_22 = arith.constant 0 : index
    %34 = vector.load %arg8[%c0_21, %c0_22] : memref<1x256xbf16, #tpu.memory_space<vmem>>, vector<1x256xbf16>
    %cst_23 = arith.constant dense<0.000000e+00> : vector<1x256xf32>
    %35 = tpu.matmul %34, %33, %cst_23 {dimension_numbers = #tpu.dot_dimension_numbers<[1], [0], [0], [1], [0, 0, 1, 1], [], []>} : vector<1x256xbf16>, vector<256x256xbf16>, vector<1x256xf32> -> vector<1x256xf32>
    %c0_24 = arith.constant 0 : index
    %36 = memref.load %arg9[%c0_24] : memref<1xf32, #tpu.memory_space<smem>>
    %37 = vector.broadcast %36 : f32 to vector<1x256xf32>
    %38 = arith.addf %35, %37 : vector<1x256xf32>
    %39 = arith.negf %38 : vector<1x256xf32>
    %40 = math.exp %39 : vector<1x256xf32>
    %cst_25 = arith.constant 1.000000e+00 : f32
    %41 = vector.broadcast %cst_25 : f32 to vector<1x256xf32>
    %42 = arith.addf %41, %40 : vector<1x256xf32>
    %43 = arith.divf %41, %42 : vector<1x256xf32>
    %c0_26 = arith.constant 0 : index
    %c0_27 = arith.constant 0 : index
    %44 = vector.load %arg10[%c0_26, %c0_27] : memref<1x256xf32, #tpu.memory_space<vmem>>, vector<1x256xf32>
    tpu.vector_store %arg10[%c0_26, %c0_27], %43 {strides = array<i32>} : memref<1x256xf32, #tpu.memory_space<vmem>>, vector<1x256xf32>,
    return
  }
  func.func @transform_0(%arg0: i32) -> (i32, i32) {
    %c0_i32 = arith.constant 0 : i32
    %c0_i32_0 = arith.constant 0 : i32
    return %c0_i32, %arg0 : i32, i32
  }
  func.func @transform_1(%arg0: i32) -> (i32, i32) {
    %c0_i32 = arith.constant 0 : i32
    %c0_i32_0 = arith.constant 0 : i32
    %c0_i32_1 = arith.constant 0 : i32
    return %c0_i32, %c0_i32_0 : i32, i32
  }
  func.func @transform_2(%arg0: i32) -> (i32, i32) {
    %c0_i32 = arith.constant 0 : i32
    %c0_i32_0 = arith.constant 0 : i32
    %c0_i32_1 = arith.constant 0 : i32
    return %c0_i32, %c0_i32_0 : i32, i32
  }
  func.func @transform_3(%arg0: i32) -> (i32, i32) {
    %c0_i32 = arith.constant 0 : i32
    %c0_i32_0 = arith.constant 0 : i32
    %c0_i32_1 = arith.constant 0 : i32
    return %c0_i32, %c0_i32_0 : i32, i32
  }
  func.func @transform_4(%arg0: i32) -> (i32, i32) {
    %c0_i32 = arith.constant 0 : i32
    %c0_i32_0 = arith.constant 0 : i32
    %c0_i32_1 = arith.constant 0 : i32
    return %c0_i32, %c0_i32_0 : i32, i32
  }
  func.func @transform_5(%arg0: i32) -> (i32, i32) {
    %c0_i32 = arith.constant 0 : i32
    %c0_i32_0 = arith.constant 0 : i32
    %c0_i32_1 = arith.constant 0 : i32
    return %c0_i32, %c0_i32_0 : i32, i32
  }
  func.func @transform_6(%arg0: i32) -> (i32, i32) {
    %c0_i32 = arith.constant 0 : i32
    %c0_i32_0 = arith.constant 0 : i32
    %c0_i32_1 = arith.constant 0 : i32
    return %c0_i32, %c0_i32_0 : i32, i32
  }
  func.func @transform_7(%arg0: i32) -> (i32, i32) {
    %c0_i32 = arith.constant 0 : i32
    %c0_i32_0 = arith.constant 0 : i32
    %c0_i32_1 = arith.constant 0 : i32
    return %c0_i32, %c0_i32_0 : i32, i32
  }
  func.func @transform_8(%arg0: i32) -> i32 {
    %c0_i32 = arith.constant 0 : i32
    %c0_i32_0 = arith.constant 0 : i32
    return %c0_i32 : i32
  }
  func.func @transform_9(%arg0: i32) -> (i32, i32) {
    %c0_i32 = arith.constant 0 : i32
    %c0_i32_0 = arith.constant 0 : i32
    return %c0_i32, %arg0 : i32, i32
  }
}

</mosaic_0001>

<llo_original>
// kernel: tpu_custom_call.1
$region0: #{tpu_custom_call.1}
  #allocation0 [shape = 'u32[]', space=smem, size = 0x4, offset = 0x4, fixed_abs, tag = 'smem constant byte address 0x4 - core index']
  #allocation1 [shape = 'u32[144,128]{1,0:T(1,128)}', space=vmem, size = 0x12000, scoped, tag = 'internal scratch']
  #allocation2 [shape = 'f32[1]{0:T(128)S(6)}', space=smem, size = 0x200, scoped, tag = 'scoped memory for tpu_custom_call.1']
  %s0 = inlined_call_operand.vmem [shape: bf16[32,256], index: 0, kind: input, shape index: {}]
  %s1 = inlined_call_operand.vmem [shape: bf16[64,32], index: 1, kind: input, shape index: {}]
  %s2 = inlined_call_operand.vmem [shape: f32[64,1], index: 2, kind: input, shape index: {}]
  %s3 = inlined_call_operand.vmem [shape: bf16[128,64], index: 3, kind: input, shape index: {}]
  %s4 = inlined_call_operand.vmem [shape: f32[128,1], index: 4, kind: input, shape index: {}]
  %s5 = inlined_call_operand.vmem [shape: bf16[256,128], index: 5, kind: input, shape index: {}]
  %s6 = inlined_call_operand.vmem [shape: f32[256,1], index: 6, kind: input, shape index: {}]
  %s7 = inlined_call_operand.vmem [shape: bf16[1,256], index: 7, kind: input, shape index: {}]
  %s8 = inlined_call_operand.<no memory space> [shape: f32[1], index: 8, kind: input, shape index: {}]
  %s9 = inlined_call_operand.hbm [shape: f32[1,256], index: 9, kind: output, shape index: {}]
  %s10 = sld [smem:[#allocation0]]
  $region46: #{tpu_custom_call.1} parent=0
    _
  %s12 = ssub.s32 1, %s10
  %s13 = scalar_select 0, %s12, %s10
  %14 = sst [smem:[#allocation2]] %s8
  $region1: #{tpu_custom_call.1} parent=0
    #allocation3 [shape = 'u8[1024]{0}', space=vmem, size = 0x400, scoped, tag = 'output window, operand 0, single buffered']
    #allocation4 [shape = 's32[1]{0}', space=sflag, size = 0x4, scoped, tag = 'scoped memory for tpu_custom_call.1']
    %15 = vsyncpa [#allocation4], 0
    // Predicated region
    $region2: #{tpu_custom_call.1} parent=1 // pred_check
      _
    $region3: #{tpu_custom_call.1} parent=1 // pred_check_branch
      %17 = sbr.rel (0) target = $region5
    $region4: #{tpu_custom_call.1} parent=1 // pred_region
      _
    $region5: #{tpu_custom_call.1} parent=1 // pred_fallthru
      _
    // Predicated region
    $region6: #{tpu_custom_call.1} parent=1 // pred_check
      _
    $region7: #{tpu_custom_call.1} parent=1 // pred_check_branch
      %19 = sbr.rel (0) target = $region9
    $region8: #{tpu_custom_call.1} parent=1 // pred_region
      _
    $region9: #{tpu_custom_call.1} parent=1 // pred_fallthru
      _
    // Predicated region
    $region10: #{tpu_custom_call.1} parent=1 // pred_check
      _
    $region11: #{tpu_custom_call.1} parent=1 // pred_check_branch
      %21 = sbr.rel (0) target = $region13
    $region12: #{tpu_custom_call.1} parent=1 // pred_region
      _
    $region13: #{tpu_custom_call.1} parent=1 // pred_fallthru
      _
    // Predicated region
    $region14: #{tpu_custom_call.1} parent=1 // pred_check
      _
    $region15: #{tpu_custom_call.1} parent=1 // pred_check_branch
      %23 = sbr.rel (0) target = $region17
    $region16: #{tpu_custom_call.1} parent=1 // pred_region
      _
    $region17: #{tpu_custom_call.1} parent=1 // pred_fallthru
      _
    // Predicated region
    $region18: #{tpu_custom_call.1} parent=1 // pred_check
      _
    $region19: #{tpu_custom_call.1} parent=1 // pred_check_branch
      %25 = sbr.rel (0) target = $region21
    $region20: #{tpu_custom_call.1} parent=1 // pred_region
      _
    $region21: #{tpu_custom_call.1} parent=1 // pred_fallthru
      _
    // Predicated region
    $region22: #{tpu_custom_call.1} parent=1 // pred_check
      _
    $region23: #{tpu_custom_call.1} parent=1 // pred_check_branch
      %27 = sbr.rel (0) target = $region25
    $region24: #{tpu_custom_call.1} parent=1 // pred_region
      _
    $region25: #{tpu_custom_call.1} parent=1 // pred_fallthru
      _
    // Predicated region
    $region26: #{tpu_custom_call.1} parent=1 // pred_check
      _
    $region27: #{tpu_custom_call.1} parent=1 // pred_check_branch
      %29 = sbr.rel (0) target = $region29
    $region28: #{tpu_custom_call.1} parent=1 // pred_region
      _
    $region29: #{tpu_custom_call.1} parent=1 // pred_fallthru
      _
    // Predicated region
    $region30: #{tpu_custom_call.1} parent=1 // pred_check
      _
    $region31: #{tpu_custom_call.1} parent=1 // pred_check_branch
      %31 = sbr.rel (0) target = $region33
    $region32: #{tpu_custom_call.1} parent=1 // pred_region
      _
    $region33: #{tpu_custom_call.1} parent=1 // pred_fallthru
      _
    // Predicated region
    $region34: #{tpu_custom_call.1} parent=1 // pred_check
      _
    $region35: #{tpu_custom_call.1} parent=1 // pred_check_branch
      %33 = sbr.rel (0) target = $region37
    $region36: #{tpu_custom_call.1} parent=1 // pred_region
      _
    $region37: #{tpu_custom_call.1} parent=1 // pred_fallthru
      _
    %v35 = vld [vmem:[%s1] sm:$0xf]
    %v36 = vld [vmem:[%s1 + $0x4] sm:$0xf]
    %v37 = vld [vmem:[%s1 + $0x8] sm:$0xf]
    %v38 = vld [vmem:[%s1 + $0xc] sm:$0xf]
    %v39 = vld [vmem:[%s1 + $0x10] sm:$0xf]
    %v40 = vld [vmem:[%s1 + $0x14] sm:$0xf]
    %v41 = vld [vmem:[%s1 + $0x18] sm:$0xf]
    %v42 = vld [vmem:[%s1 + $0x1c] sm:$0xf]
    %v43 = vld [vmem:[%s0] sm:$0xff]
    %v44 = vld [vmem:[%s0 + $0x8] sm:$0xff]
    %v45 = vld [vmem:[%s0 + $0x10] sm:$0xff]
    %v46 = vld [vmem:[%s0 + $0x18] sm:$0xff]
    %v47 = vld [vmem:[%s2] sm:$0xff]
    %v48 = vld [vmem:[%s2 + $0x8] sm:$0xff]
    %v49 = vld [vmem:[%s2 + $0x10] sm:$0xff]
    %v50 = vld [vmem:[%s2 + $0x18] sm:$0xff]
    %v51 = vld [vmem:[%s2 + $0x20] sm:$0xff]
    %v52 = vld [vmem:[%s2 + $0x28] sm:$0xff]
    %v53 = vld [vmem:[%s2 + $0x30] sm:$0xff]
    %v54 = vld [vmem:[%s2 + $0x38] sm:$0xff]
    %56 = vset.pattern.permute.xlu0 0
    %57 = vperm.xlu0 %56, %v47
    %v58 = vpop.permute.xlu0 %57
    %61 = vset.pattern.permute.xlu0 0
    %62 = vperm.xlu0 %61, %v48
    %v63 = vpop.permute.xlu0 %62
    %66 = vset.pattern.permute.xlu0 0
    %67 = vperm.xlu0 %66, %v49
    %v68 = vpop.permute.xlu0 %67
    %71 = vset.pattern.permute.xlu0 0
    %72 = vperm.xlu0 %71, %v50
    %v73 = vpop.permute.xlu0 %72
    %76 = vset.pattern.permute.xlu0 0
    %77 = vperm.xlu0 %76, %v51
    %v78 = vpop.permute.xlu0 %77
    %81 = vset.pattern.permute.xlu0 0
    %82 = vperm.xlu0 %81, %v52
    %v83 = vpop.permute.xlu0 %82
    %86 = vset.pattern.permute.xlu0 0
    %87 = vperm.xlu0 %86, %v53
    %v88 = vpop.permute.xlu0 %87
    %91 = vset.pattern.permute.xlu0 0
    %92 = vperm.xlu0 %91, %v54
    %v93 = vpop.permute.xlu0 %92
    %v103 = vunpack.c.l.b16 %v35
    %v104 = vunpack.c.l.b16 %v36
    %v105 = vunpack.c.l.b16 %v37
    %v106 = vunpack.c.l.b16 %v38
    %v107 = vunpack.c.l.b16 %v39
    %v108 = vunpack.c.l.b16 %v40
    %v109 = vunpack.c.l.b16 %v41
    %v110 = vunpack.c.l.b16 %v42
    %v111 = vpack.c.b16 %v104, %v103
    %v112 = vpack.c.b16 %v106, %v105
    %v113 = vpack.c.b16 %v108, %v107
    %v114 = vpack.c.b16 %v110, %v109
    %v119 = vunpack.c.l.b16 %v43
    %v120 = vunpack.c.h.b16 %v43
    %v121 = vunpack.c.l.b16 %v44
    %v122 = vunpack.c.h.b16 %v44
    %v123 = vunpack.c.l.b16 %v45
    %v124 = vunpack.c.h.b16 %v45
    %v125 = vunpack.c.l.b16 %v46
    %v126 = vunpack.c.h.b16 %v46
    %v127 = vpack.c.b16 %v121, %v119
    %v128 = vpack.c.b16 %v122, %v120
    %v129 = vpack.c.b16 %v125, %v123
    %v130 = vpack.c.b16 %v126, %v124
    %vm135 = vcmask 261120
    %v137 = vsel %vm135, %v111, 0
    %v140 = vsel %vm135, %v112, 0
    %v143 = vsel %vm135, %v113, 0
    %v146 = vsel %vm135, %v114, 0
    %148 = vmatprep.subr.bf16.mxu0 %v128
    %149 = vmatpush1.bf16.msra.mxu0 %v127
    %150 = vmatprep.subr.bf16.mxu0 %v130
    %151 = vmatpush1.bf16.msra.mxu0 %v129
    %152 = vmatprep.subr.bf16.mxu0 0
    %153 = vmatpush1.bf16.msra.mxu0 0
    %154 = vmatprep.subr.bf16.mxu0 0
    %155 = vmatpush1.bf16.msra.mxu0 0
    %156 = vmatprep.subr.bf16.mxu0 0
    %157 = vmatpush1.bf16.msra.mxu0 0
    %158 = vmatprep.subr.bf16.mxu0 0
    %159 = vmatpush1.bf16.msra.mxu0 0
    %160 = vmatprep.subr.bf16.mxu0 0
    %161 = vmatpush1.bf16.msra.mxu0 0
    %162 = vmatprep.subr.bf16.mxu0 0
    %163 = vmatpush1.bf16.msra.mxu0 0
    %164 = vmatprep.subr.bf16.mxu0 0
    %165 = vmatpush1.bf16.msra.mxu0 0
    %166 = vmatprep.subr.bf16.mxu0 0
    %167 = vmatpush1.bf16.msra.mxu0 0
    %168 = vmatprep.subr.bf16.mxu0 0
    %169 = vmatpush1.bf16.msra.mxu0 0
    %170 = vmatprep.subr.bf16.mxu0 0
    %171 = vmatpush1.bf16.msra.mxu0 0
    %172 = vmatprep.subr.bf16.mxu0 0
    %173 = vmatpush1.bf16.msra.mxu0 0
    %174 = vmatprep.subr.bf16.mxu0 0
    %175 = vmatpush1.bf16.msra.mxu0 0
    %176 = vmatprep.subr.bf16.mxu0 0
    %177 = vmatpush1.bf16.msra.mxu0 0
    %178 = vmatprep.subr.bf16.mxu0 0
    %179 = vmatpush1.bf16.msra.mxu0 0
    %180 = vmatprep.mubr.bf16.mxu0 0
    %181 = vmatmul.mubr.bf16.gmra.mrb[0].mxu0 %v137
    %v182 = vpop.f32.mrb[0].mxu0
    %v183 = vadd.f32 %v58, %v182
    %v184 = vpop.f32.mrb[0].mxu0
    %v185 = vadd.f32 %v58, %v184
    %v186 = vpop.f32.mrb[0].mxu0
    %v187 = vadd.f32 %v63, %v186
    %v188 = vpop.f32.mrb[0].mxu0
    %v189 = vadd.f32 %v63, %v188
    %190 = vmatprep.mubr.bf16.mxu0 0
    %191 = vmatmul.mubr.bf16.gmra.mrb[0].mxu0 %v140
    %v192 = vpop.f32.mrb[0].mxu0
    %v193 = vadd.f32 %v68, %v192
    %v194 = vpop.f32.mrb[0].mxu0
    %v195 = vadd.f32 %v68, %v194
    %v196 = vpop.f32.mrb[0].mxu0
    %v197 = vadd.f32 %v73, %v196
    %v198 = vpop.f32.mrb[0].mxu0
    %v199 = vadd.f32 %v73, %v198
    %200 = vmatprep.mubr.bf16.mxu0 0
    %201 = vmatmul.mubr.bf16.gmra.mrb[0].mxu0 %v143
    %v202 = vpop.f32.mrb[0].mxu0
    %v203 = vadd.f32 %v78, %v202
    %v204 = vpop.f32.mrb[0].mxu0
    %v205 = vadd.f32 %v78, %v204
    %v206 = vpop.f32.mrb[0].mxu0
    %v207 = vadd.f32 %v83, %v206
    %v208 = vpop.f32.mrb[0].mxu0
    %v209 = vadd.f32 %v83, %v208
    %210 = vmatprep.mubr.bf16.mxu0 0
    %211 = vmatmul.mubr.bf16.gmra.mrb[0].mxu0 %v146
    %v212 = vpop.f32.mrb[0].mxu0
    %v213 = vadd.f32 %v88, %v212
    %v214 = vpop.f32.mrb[0].mxu0
    %v215 = vadd.f32 %v88, %v214
    %v216 = vpop.f32.mrb[0].mxu0
    %v217 = vadd.f32 %v93, %v216
    %v218 = vpop.f32.mrb[0].mxu0
    %v219 = vadd.f32 %v93, %v218
    %220 = vdwg.mxu0
    %vm221 = vcmp.gt.f32.partialorder %v183, 0.0
    %vm222 = vcmp.gt.f32.partialorder %v185, 0.0
    %vm223 = vcmp.gt.f32.partialorder %v187, 0.0
    %vm224 = vcmp.gt.f32.partialorder %v189, 0.0
    %vm225 = vcmp.gt.f32.partialorder %v193, 0.0
    %vm226 = vcmp.gt.f32.partialorder %v195, 0.0
    %vm227 = vcmp.gt.f32.partialorder %v197, 0.0
    %vm228 = vcmp.gt.f32.partialorder %v199, 0.0
    %vm229 = vcmp.gt.f32.partialorder %v203, 0.0
    %vm230 = vcmp.gt.f32.partialorder %v205, 0.0
    %vm231 = vcmp.gt.f32.partialorder %v207, 0.0
    %vm232 = vcmp.gt.f32.partialorder %v209, 0.0
    %vm233 = vcmp.gt.f32.partialorder %v213, 0.0
    %vm234 = vcmp.gt.f32.partialorder %v215, 0.0
    %vm235 = vcmp.gt.f32.partialorder %v217, 0.0
    %vm236 = vcmp.gt.f32.partialorder %v219, 0.0
    %v237 = vmul.f32 %v183, 0.2
    %v238 = vmul.f32 %v185, 0.2
    %v239 = vmul.f32 %v187, 0.2
    %v240 = vmul.f32 %v189, 0.2
    %v241 = vmul.f32 %v193, 0.2
    %v242 = vmul.f32 %v195, 0.2
    %v243 = vmul.f32 %v197, 0.2
    %v244 = vmul.f32 %v199, 0.2
    %v245 = vmul.f32 %v203, 0.2
    %v246 = vmul.f32 %v205, 0.2
    %v247 = vmul.f32 %v207, 0.2
    %v248 = vmul.f32 %v209, 0.2
    %v249 = vmul.f32 %v213, 0.2
    %v250 = vmul.f32 %v215, 0.2
    %v251 = vmul.f32 %v217, 0.2
    %v252 = vmul.f32 %v219, 0.2
    %v253 = vsel %vm221, %v183, %v237
    %v254 = vsel %vm222, %v185, %v238
    %v255 = vsel %vm223, %v187, %v239
    %v256 = vsel %vm224, %v189, %v240
    %v257 = vsel %vm225, %v193, %v241
    %v258 = vsel %vm226, %v195, %v242
    %v259 = vsel %vm227, %v197, %v243
    %v260 = vsel %vm228, %v199, %v244
    %v261 = vsel %vm229, %v203, %v245
    %v262 = vsel %vm230, %v205, %v246
    %v263 = vsel %vm231, %v207, %v247
    %v264 = vsel %vm232, %v209, %v248
    %v265 = vsel %vm233, %v213, %v249
    %v266 = vsel %vm234, %v215, %v250
    %v267 = vsel %vm235, %v217, %v251
    %v268 = vsel %vm236, %v219, %v252
    %v269 = vpack.c.bf16 %v255, %v253
    %v270 = vpack.c.bf16 %v256, %v254
    %v271 = vpack.c.bf16 %v259, %v257
    %v272 = vpack.c.bf16 %v260, %v258
    %v273 = vpack.c.bf16 %v263, %v261
    %v274 = vpack.c.bf16 %v264, %v262
    %v275 = vpack.c.bf16 %v267, %v265
    %v276 = vpack.c.bf16 %v268, %v266
    %v277 = vld [vmem:[%s3] sm:$0xf]
    %v278 = vld [vmem:[%s3 + $0x4] sm:$0xf]
    %v279 = vld [vmem:[%s3 + $0x8] sm:$0xf]
    %v280 = vld [vmem:[%s3 + $0xc] sm:$0xf]
    %v281 = vld [vmem:[%s3 + $0x10] sm:$0xf]
    %v282 = vld [vmem:[%s3 + $0x14] sm:$0xf]
    %v283 = vld [vmem:[%s3 + $0x18] sm:$0xf]
    %v284 = vld [vmem:[%s3 + $0x1c] sm:$0xf]
    %v285 = vld [vmem:[%s3 + $0x20] sm:$0xf]
    %v286 = vld [vmem:[%s3 + $0x24] sm:$0xf]
    %v287 = vld [vmem:[%s3 + $0x28] sm:$0xf]
    %v288 = vld [vmem:[%s3 + $0x2c] sm:$0xf]
    %v289 = vld [vmem:[%s3 + $0x30] sm:$0xf]
    %v290 = vld [vmem:[%s3 + $0x34] sm:$0xf]
    %v291 = vld [vmem:[%s3 + $0x38] sm:$0xf]
    %v292 = vld [vmem:[%s3 + $0x3c] sm:$0xf]
    %v293 = vld [vmem:[%s4] sm:$0xff]
    %v294 = vld [vmem:[%s4 + $0x8] sm:$0xff]
    %v295 = vld [vmem:[%s4 + $0x10] sm:$0xff]
    %v296 = vld [vmem:[%s4 + $0x18] sm:$0xff]
    %v297 = vld [vmem:[%s4 + $0x20] sm:$0xff]
    %v298 = vld [vmem:[%s4 + $0x28] sm:$0xff]
    %v299 = vld [vmem:[%s4 + $0x30] sm:$0xff]
    %v300 = vld [vmem:[%s4 + $0x38] sm:$0xff]
    %v301 = vld [vmem:[%s4 + $0x40] sm:$0xff]
    %v302 = vld [vmem:[%s4 + $0x48] sm:$0xff]
    %v303 = vld [vmem:[%s4 + $0x50] sm:$0xff]
    %v304 = vld [vmem:[%s4 + $0x58] sm:$0xff]
    %v305 = vld [vmem:[%s4 + $0x60] sm:$0xff]
    %v306 = vld [vmem:[%s4 + $0x68] sm:$0xff]
    %v307 = vld [vmem:[%s4 + $0x70] sm:$0xff]
    %v308 = vld [vmem:[%s4 + $0x78] sm:$0xff]
    %310 = vset.pattern.permute.xlu0 0
    %311 = vperm.xlu0 %310, %v293
    %v312 = vpop.permute.xlu0 %311
    %315 = vset.pattern.permute.xlu0 0
    %316 = vperm.xlu0 %315, %v294
    %v317 = vpop.permute.xlu0 %316
    %320 = vset.pattern.permute.xlu0 0
    %321 = vperm.xlu0 %320, %v295
    %v322 = vpop.permute.xlu0 %321
    %325 = vset.pattern.permute.xlu0 0
    %326 = vperm.xlu0 %325, %v296
    %v327 = vpop.permute.xlu0 %326
    %330 = vset.pattern.permute.xlu0 0
    %331 = vperm.xlu0 %330, %v297
    %v332 = vpop.permute.xlu0 %331
    %335 = vset.pattern.permute.xlu0 0
    %336 = vperm.xlu0 %335, %v298
    %v337 = vpop.permute.xlu0 %336
    %340 = vset.pattern.permute.xlu0 0
    %341 = vperm.xlu0 %340, %v299
    %v342 = vpop.permute.xlu0 %341
    %345 = vset.pattern.permute.xlu0 0
    %346 = vperm.xlu0 %345, %v300
    %v347 = vpop.permute.xlu0 %346
    %350 = vset.pattern.permute.xlu0 0
    %351 = vperm.xlu0 %350, %v301
    %v352 = vpop.permute.xlu0 %351
    %355 = vset.pattern.permute.xlu0 0
    %356 = vperm.xlu0 %355, %v302
    %v357 = vpop.permute.xlu0 %356
    %360 = vset.pattern.permute.xlu0 0
    %361 = vperm.xlu0 %360, %v303
    %v362 = vpop.permute.xlu0 %361
    %365 = vset.pattern.permute.xlu0 0
    %366 = vperm.xlu0 %365, %v304
    %v367 = vpop.permute.xlu0 %366
    %370 = vset.pattern.permute.xlu0 0
    %371 = vperm.xlu0 %370, %v305
    %v372 = vpop.permute.xlu0 %371
    %375 = vset.pattern.permute.xlu0 0
    %376 = vperm.xlu0 %375, %v306
    %v377 = vpop.permute.xlu0 %376
    %380 = vset.pattern.permute.xlu0 0
    %381 = vperm.xlu0 %380, %v307
    %v382 = vpop.permute.xlu0 %381
    %385 = vset.pattern.permute.xlu0 0
    %386 = vperm.xlu0 %385, %v308
    %v387 = vpop.permute.xlu0 %386
    %v405 = vunpack.c.l.b16 %v277
    %v406 = vunpack.c.l.b16 %v278
    %v407 = vunpack.c.l.b16 %v279
    %v408 = vunpack.c.l.b16 %v280
    %v409 = vunpack.c.l.b16 %v281
    %v410 = vunpack.c.l.b16 %v282
    %v411 = vunpack.c.l.b16 %v283
    %v412 = vunpack.c.l.b16 %v284
    %v413 = vunpack.c.l.b16 %v285
    %v414 = vunpack.c.l.b16 %v286
    %v415 = vunpack.c.l.b16 %v287
    %v416 = vunpack.c.l.b16 %v288
    %v417 = vunpack.c.l.b16 %v289
    %v418 = vunpack.c.l.b16 %v290
    %v419 = vunpack.c.l.b16 %v291
    %v420 = vunpack.c.l.b16 %v292
    %v421 = vpack.c.b16 %v406, %v405
    %v422 = vpack.c.b16 %v408, %v407
    %v423 = vpack.c.b16 %v410, %v409
    %v424 = vpack.c.b16 %v412, %v411
    %v425 = vpack.c.b16 %v414, %v413
    %v426 = vpack.c.b16 %v416, %v415
    %v427 = vpack.c.b16 %v418, %v417
    %v428 = vpack.c.b16 %v420, %v419
    %vm429 = vcmask 523264
    %v431 = vsel %vm429, %v421, 0
    %v434 = vsel %vm429, %v422, 0
    %v437 = vsel %vm429, %v423, 0
    %v440 = vsel %vm429, %v424, 0
    %v443 = vsel %vm429, %v425, 0
    %v446 = vsel %vm429, %v426, 0
    %v449 = vsel %vm429, %v427, 0
    %v452 = vsel %vm429, %v428, 0
    %454 = vmatprep.subr.bf16.mxu0 %v270
    %455 = vmatpush1.bf16.msra.mxu0 %v269
    %456 = vmatprep.subr.bf16.mxu0 %v272
    %457 = vmatpush1.bf16.msra.mxu0 %v271
    %458 = vmatprep.subr.bf16.mxu0 %v274
    %459 = vmatpush1.bf16.msra.mxu0 %v273
    %460 = vmatprep.subr.bf16.mxu0 %v276
    %461 = vmatpush1.bf16.msra.mxu0 %v275
    %462 = vmatprep.subr.bf16.mxu0 0
    %463 = vmatpush1.bf16.msra.mxu0 0
    %464 = vmatprep.subr.bf16.mxu0 0
    %465 = vmatpush1.bf16.msra.mxu0 0
    %466 = vmatprep.subr.bf16.mxu0 0
    %467 = vmatpush1.bf16.msra.mxu0 0
    %468 = vmatprep.subr.bf16.mxu0 0
    %469 = vmatpush1.bf16.msra.mxu0 0
    %470 = vmatprep.subr.bf16.mxu0 0
    %471 = vmatpush1.bf16.msra.mxu0 0
    %472 = vmatprep.subr.bf16.mxu0 0
    %473 = vmatpush1.bf16.msra.mxu0 0
    %474 = vmatprep.subr.bf16.mxu0 0
    %475 = vmatpush1.bf16.msra.mxu0 0
    %476 = vmatprep.subr.bf16.mxu0 0
    %477 = vmatpush1.bf16.msra.mxu0 0
    %478 = vmatprep.subr.bf16.mxu0 0
    %479 = vmatpush1.bf16.msra.mxu0 0
    %480 = vmatprep.subr.bf16.mxu0 0
    %481 = vmatpush1.bf16.msra.mxu0 0
    %482 = vmatprep.subr.bf16.mxu0 0
    %483 = vmatpush1.bf16.msra.mxu0 0
    %484 = vmatprep.subr.bf16.mxu0 0
    %485 = vmatpush1.bf16.msra.mxu0 0
    %486 = vmatprep.mubr.bf16.mxu0 0
    %487 = vmatmul.mubr.bf16.gmra.mrb[0].mxu0 %v431
    %v488 = vpop.f32.mrb[0].mxu0
    %v489 = vadd.f32 %v312, %v488
    %v490 = vpop.f32.mrb[0].mxu0
    %v491 = vadd.f32 %v312, %v490
    %v492 = vpop.f32.mrb[0].mxu0
    %v493 = vadd.f32 %v317, %v492
    %v494 = vpop.f32.mrb[0].mxu0
    %v495 = vadd.f32 %v317, %v494
    %496 = vmatprep.mubr.bf16.mxu0 0
    %497 = vmatmul.mubr.bf16.gmra.mrb[0].mxu0 %v434
    %v498 = vpop.f32.mrb[0].mxu0
    %v499 = vadd.f32 %v322, %v498
    %v500 = vpop.f32.mrb[0].mxu0
    %v501 = vadd.f32 %v322, %v500
    %v502 = vpop.f32.mrb[0].mxu0
    %v503 = vadd.f32 %v327, %v502
    %v504 = vpop.f32.mrb[0].mxu0
    %v505 = vadd.f32 %v327, %v504
    %506 = vmatprep.mubr.bf16.mxu0 0
    %507 = vmatmul.mubr.bf16.gmra.mrb[0].mxu0 %v437
    %v508 = vpop.f32.mrb[0].mxu0
    %v509 = vadd.f32 %v332, %v508
    %v510 = vpop.f32.mrb[0].mxu0
    %v511 = vadd.f32 %v332, %v510
    %v512 = vpop.f32.mrb[0].mxu0
    %v513 = vadd.f32 %v337, %v512
    %v514 = vpop.f32.mrb[0].mxu0
    %v515 = vadd.f32 %v337, %v514
    %516 = vmatprep.mubr.bf16.mxu0 0
    %517 = vmatmul.mubr.bf16.gmra.mrb[0].mxu0 %v440
    %v518 = vpop.f32.mrb[0].mxu0
    %v519 = vadd.f32 %v342, %v518
    %v520 = vpop.f32.mrb[0].mxu0
    %v521 = vadd.f32 %v342, %v520
    %v522 = vpop.f32.mrb[0].mxu0
    %v523 = vadd.f32 %v347, %v522
    %v524 = vpop.f32.mrb[0].mxu0
    %v525 = vadd.f32 %v347, %v524
    %526 = vmatprep.mubr.bf16.mxu0 0
    %527 = vmatmul.mubr.bf16.gmra.mrb[0].mxu0 %v443
    %v528 = vpop.f32.mrb[0].mxu0
    %v529 = vadd.f32 %v352, %v528
    %v530 = vpop.f32.mrb[0].mxu0
    %v531 = vadd.f32 %v352, %v530
    %v532 = vpop.f32.mrb[0].mxu0
    %v533 = vadd.f32 %v357, %v532
    %v534 = vpop.f32.mrb[0].mxu0
    %v535 = vadd.f32 %v357, %v534
    %536 = vmatprep.mubr.bf16.mxu0 0
    %537 = vmatmul.mubr.bf16.gmra.mrb[0].mxu0 %v446
    %v538 = vpop.f32.mrb[0].mxu0
    %v539 = vadd.f32 %v362, %v538
    %v540 = vpop.f32.mrb[0].mxu0
    %v541 = vadd.f32 %v362, %v540
    %v542 = vpop.f32.mrb[0].mxu0
    %v543 = vadd.f32 %v367, %v542
    %v544 = vpop.f32.mrb[0].mxu0
    %v545 = vadd.f32 %v367, %v544
    %546 = vmatprep.mubr.bf16.mxu0 0
    %547 = vmatmul.mubr.bf16.gmra.mrb[0].mxu0 %v449
    %v548 = vpop.f32.mrb[0].mxu0
    %v549 = vadd.f32 %v372, %v548
    %v550 = vpop.f32.mrb[0].mxu0
    %v551 = vadd.f32 %v372, %v550
    %v552 = vpop.f32.mrb[0].mxu0
    %v553 = vadd.f32 %v377, %v552
    %v554 = vpop.f32.mrb[0].mxu0
    %v555 = vadd.f32 %v377, %v554
    %556 = vmatprep.mubr.bf16.mxu0 0
    %557 = vmatmul.mubr.bf16.gmra.mrb[0].mxu0 %v452
    %v558 = vpop.f32.mrb[0].mxu0
    %v559 = vadd.f32 %v382, %v558
    %v560 = vpop.f32.mrb[0].mxu0
    %v561 = vadd.f32 %v382, %v560
    %v562 = vpop.f32.mrb[0].mxu0
    %v563 = vadd.f32 %v387, %v562
    %v564 = vpop.f32.mrb[0].mxu0
    %v565 = vadd.f32 %v387, %v564
    %566 = vdwg.mxu0
    %vm567 = vcmp.gt.f32.partialorder %v489, 0.0
    %vm568 = vcmp.gt.f32.partialorder %v491, 0.0
    %vm569 = vcmp.gt.f32.partialorder %v493, 0.0
    %vm570 = vcmp.gt.f32.partialorder %v495, 0.0
    %vm571 = vcmp.gt.f32.partialorder %v499, 0.0
    %vm572 = vcmp.gt.f32.partialorder %v501, 0.0
    %vm573 = vcmp.gt.f32.partialorder %v503, 0.0
    %vm574 = vcmp.gt.f32.partialorder %v505, 0.0
    %vm575 = vcmp.gt.f32.partialorder %v509, 0.0
    %vm576 = vcmp.gt.f32.partialorder %v511, 0.0
    %vm577 = vcmp.gt.f32.partialorder %v513, 0.0
    %vm578 = vcmp.gt.f32.partialorder %v515, 0.0
    %vm579 = vcmp.gt.f32.partialorder %v519, 0.0
    %vm580 = vcmp.gt.f32.partialorder %v521, 0.0
    %vm581 = vcmp.gt.f32.partialorder %v523, 0.0
    %vm582 = vcmp.gt.f32.partialorder %v525, 0.0
    %vm583 = vcmp.gt.f32.partialorder %v529, 0.0
    %vm584 = vcmp.gt.f32.partialorder %v531, 0.0
    %vm585 = vcmp.gt.f32.partialorder %v533, 0.0
    %vm586 = vcmp.gt.f32.partialorder %v535, 0.0
    %vm587 = vcmp.gt.f32.partialorder %v539, 0.0
    %vm588 = vcmp.gt.f32.partialorder %v541, 0.0
    %vm589 = vcmp.gt.f32.partialorder %v543, 0.0
    %vm590 = vcmp.gt.f32.partialorder %v545, 0.0
    %vm591 = vcmp.gt.f32.partialorder %v549, 0.0
    %vm592 = vcmp.gt.f32.partialorder %v551, 0.0
    %vm593 = vcmp.gt.f32.partialorder %v553, 0.0
    %vm594 = vcmp.gt.f32.partialorder %v555, 0.0
    %vm595 = vcmp.gt.f32.partialorder %v559, 0.0
    %vm596 = vcmp.gt.f32.partialorder %v561, 0.0
    %vm597 = vcmp.gt.f32.partialorder %v563, 0.0
    %vm598 = vcmp.gt.f32.partialorder %v565, 0.0
    %v599 = vmul.f32 %v489, 0.2
    %v600 = vmul.f32 %v491, 0.2
    %v601 = vmul.f32 %v493, 0.2
    %v602 = vmul.f32 %v495, 0.2
    %v603 = vmul.f32 %v499, 0.2
    %v604 = vmul.f32 %v501, 0.2
    %v605 = vmul.f32 %v503, 0.2
    %v606 = vmul.f32 %v505, 0.2
    %v607 = vmul.f32 %v509, 0.2
    %v608 = vmul.f32 %v511, 0.2
    %v609 = vmul.f32 %v513, 0.2
    %v610 = vmul.f32 %v515, 0.2
    %v611 = vmul.f32 %v519, 0.2
    %v612 = vmul.f32 %v521, 0.2
    %v613 = vmul.f32 %v523, 0.2
    %v614 = vmul.f32 %v525, 0.2
    %v615 = vmul.f32 %v529, 0.2
    %v616 = vmul.f32 %v531, 0.2
    %v617 = vmul.f32 %v533, 0.2
    %v618 = vmul.f32 %v535, 0.2
    %v619 = vmul.f32 %v539, 0.2
    %v620 = vmul.f32 %v541, 0.2
    %v621 = vmul.f32 %v543, 0.2
    %v622 = vmul.f32 %v545, 0.2
    %v623 = vmul.f32 %v549, 0.2
    %v624 = vmul.f32 %v551, 0.2
    %v625 = vmul.f32 %v553, 0.2
    %v626 = vmul.f32 %v555, 0.2
    %v627 = vmul.f32 %v559, 0.2
    %v628 = vmul.f32 %v561, 0.2
    %v629 = vmul.f32 %v563, 0.2
    %v630 = vmul.f32 %v565, 0.2
    %v631 = vsel %vm567, %v489, %v599
    %v632 = vsel %vm568, %v491, %v600
    %v633 = vsel %vm569, %v493, %v601
    %v634 = vsel %vm570, %v495, %v602
    %v635 = vsel %vm571, %v499, %v603
    %v636 = vsel %vm572, %v501, %v604
    %v637 = vsel %vm573, %v503, %v605
    %v638 = vsel %vm574, %v505, %v606
    %v639 = vsel %vm575, %v509, %v607
    %v640 = vsel %vm576, %v511, %v608
    %v641 = vsel %vm577, %v513, %v609
    %v642 = vsel %vm578, %v515, %v610
    %v643 = vsel %vm579, %v519, %v611
    %v644 = vsel %vm580, %v521, %v612
    %v645 = vsel %vm581, %v523, %v613
    %v646 = vsel %vm582, %v525, %v614
    %v647 = vsel %vm583, %v529, %v615
    %v648 = vsel %vm584, %v531, %v616
    %v649 = vsel %vm585, %v533, %v617
    %v650 = vsel %vm586, %v535, %v618
    %v651 = vsel %vm587, %v539, %v619
    %v652 = vsel %vm588, %v541, %v620
    %v653 = vsel %vm589, %v543, %v621
    %v654 = vsel %vm590, %v545, %v622
    %v655 = vsel %vm591, %v549, %v623
    %v656 = vsel %vm592, %v551, %v624
    %v657 = vsel %vm593, %v553, %v625
    %v658 = vsel %vm594, %v555, %v626
    %v659 = vsel %vm595, %v559, %v627
    %v660 = vsel %vm596, %v561, %v628
    %v661 = vsel %vm597, %v563, %v629
    %v662 = vsel %vm598, %v565, %v630
    %v663 = vpack.c.bf16 %v633, %v631
    %v664 = vpack.c.bf16 %v634, %v632
    %v665 = vpack.c.bf16 %v637, %v635
    %v666 = vpack.c.bf16 %v638, %v636
    %v667 = vpack.c.bf16 %v641, %v639
    %v668 = vpack.c.bf16 %v642, %v640
    %v669 = vpack.c.bf16 %v645, %v643
    %v670 = vpack.c.bf16 %v646, %v644
    %v671 = vpack.c.bf16 %v649, %v647
    %v672 = vpack.c.bf16 %v650, %v648
    %v673 = vpack.c.bf16 %v653, %v651
    %v674 = vpack.c.bf16 %v654, %v652
    %v675 = vpack.c.bf16 %v657, %v655
    %v676 = vpack.c.bf16 %v658, %v656
    %v677 = vpack.c.bf16 %v661, %v659
    %v678 = vpack.c.bf16 %v662, %v660
    %v679 = vld [vmem:[%s5] sm:$0xf]
    %v680 = vld [vmem:[%s5 + $0x4] sm:$0xf]
    %v681 = vld [vmem:[%s5 + $0x8] sm:$0xf]
    %v682 = vld [vmem:[%s5 + $0xc] sm:$0xf]
    %v683 = vld [vmem:[%s5 + $0x10] sm:$0xf]
    %v684 = vld [vmem:[%s5 + $0x14] sm:$0xf]
    %v685 = vld [vmem:[%s5 + $0x18] sm:$0xf]
    %v686 = vld [vmem:[%s5 + $0x1c] sm:$0xf]
    %v687 = vld [vmem:[%s5 + $0x20] sm:$0xf]
    %v688 = vld [vmem:[%s5 + $0x24] sm:$0xf]
    %v689 = vld [vmem:[%s5 + $0x28] sm:$0xf]
    %v690 = vld [vmem:[%s5 + $0x2c] sm:$0xf]
    %v691 = vld [vmem:[%s5 + $0x30] sm:$0xf]
    %v692 = vld [vmem:[%s5 + $0x34] sm:$0xf]
    %v693 = vld [vmem:[%s5 + $0x38] sm:$0xf]
    %v694 = vld [vmem:[%s5 + $0x3c] sm:$0xf]
    %v695 = vld [vmem:[%s5 + $0x40] sm:$0xf]
    %v696 = vld [vmem:[%s5 + $0x44] sm:$0xf]
    %v697 = vld [vmem:[%s5 + $0x48] sm:$0xf]
    %v698 = vld [vmem:[%s5 + $0x4c] sm:$0xf]
    %v699 = vld [vmem:[%s5 + $0x50] sm:$0xf]
    %v700 = vld [vmem:[%s5 + $0x54] sm:$0xf]
    %v701 = vld [vmem:[%s5 + $0x58] sm:$0xf]
    %v702 = vld [vmem:[%s5 + $0x5c] sm:$0xf]
    %v703 = vld [vmem:[%s5 + $0x60] sm:$0xf]
    %v704 = vld [vmem:[%s5 + $0x64] sm:$0xf]
    %v705 = vld [vmem:[%s5 + $0x68] sm:$0xf]
    %v706 = vld [vmem:[%s5 + $0x6c] sm:$0xf]
    %v707 = vld [vmem:[%s5 + $0x70] sm:$0xf]
    %v708 = vld [vmem:[%s5 + $0x74] sm:$0xf]
    %v709 = vld [vmem:[%s5 + $0x78] sm:$0xf]
    %v710 = vld [vmem:[%s5 + $0x7c] sm:$0xf]
    %v711 = vld [vmem:[%s6] sm:$0xff]
    %v712 = vld [vmem:[%s6 + $0x8] sm:$0xff]
    %v713 = vld [vmem:[%s6 + $0x10] sm:$0xff]
    %v714 = vld [vmem:[%s6 + $0x18] sm:$0xff]
    %v715 = vld [vmem:[%s6 + $0x20] sm:$0xff]
    %v716 = vld [vmem:[%s6 + $0x28] sm:$0xff]
    %v717 = vld [vmem:[%s6 + $0x30] sm:$0xff]
    %v718 = vld [vmem:[%s6 + $0x38] sm:$0xff]
    %v719 = vld [vmem:[%s6 + $0x40] sm:$0xff]
    %v720 = vld [vmem:[%s6 + $0x48] sm:$0xff]
    %v721 = vld [vmem:[%s6 + $0x50] sm:$0xff]
    %v722 = vld [vmem:[%s6 + $0x58] sm:$0xff]
    %v723 = vld [vmem:[%s6 + $0x60] sm:$0xff]
    %v724 = vld [vmem:[%s6 + $0x68] sm:$0xff]
    %v725 = vld [vmem:[%s6 + $0x70] sm:$0xff]
    %v726 = vld [vmem:[%s6 + $0x78] sm:$0xff]
    %v727 = vld [vmem:[%s6 + $0x80] sm:$0xff]
    %v728 = vld [vmem:[%s6 + $0x88] sm:$0xff]
    %v729 = vld [vmem:[%s6 + $0x90] sm:$0xff]
    %v730 = vld [vmem:[%s6 + $0x98] sm:$0xff]
    %v731 = vld [vmem:[%s6 + $0xa0] sm:$0xff]
    %v732 = vld [vmem:[%s6 + $0xa8] sm:$0xff]
    %v733 = vld [vmem:[%s6 + $0xb0] sm:$0xff]
    %v734 = vld [vmem:[%s6 + $0xb8] sm:$0xff]
    %v735 = vld [vmem:[%s6 + $0xc0] sm:$0xff]
    %v736 = vld [vmem:[%s6 + $0xc8] sm:$0xff]
    %v737 = vld [vmem:[%s6 + $0xd0] sm:$0xff]
    %v738 = vld [vmem:[%s6 + $0xd8] sm:$0xff]
    %v739 = vld [vmem:[%s6 + $0xe0] sm:$0xff]
    %v740 = vld [vmem:[%s6 + $0xe8] sm:$0xff]
    %v741 = vld [vmem:[%s6 + $0xf0] sm:$0xff]
    %v742 = vld [vmem:[%s6 + $0xf8] sm:$0xff]
    %744 = vset.pattern.permute.xlu0 0
    %745 = vperm.xlu0 %744, %v711
    %v746 = vpop.permute.xlu0 %745
    %749 = vset.pattern.permute.xlu0 0
    %750 = vperm.xlu0 %749, %v712
    %v751 = vpop.permute.xlu0 %750
    %754 = vset.pattern.permute.xlu0 0
    %755 = vperm.xlu0 %754, %v713
    %v756 = vpop.permute.xlu0 %755
    %759 = vset.pattern.permute.xlu0 0
    %760 = vperm.xlu0 %759, %v714
    %v761 = vpop.permute.xlu0 %760
    %764 = vset.pattern.permute.xlu0 0
    %765 = vperm.xlu0 %764, %v715
    %v766 = vpop.permute.xlu0 %765
    %769 = vset.pattern.permute.xlu0 0
    %770 = vperm.xlu0 %769, %v716
    %v771 = vpop.permute.xlu0 %770
    %774 = vset.pattern.permute.xlu0 0
    %775 = vperm.xlu0 %774, %v717
    %v776 = vpop.permute.xlu0 %775
    %779 = vset.pattern.permute.xlu0 0
    %780 = vperm.xlu0 %779, %v718
    %v781 = vpop.permute.xlu0 %780
    %784 = vset.pattern.permute.xlu0 0
    %785 = vperm.xlu0 %784, %v719
    %v786 = vpop.permute.xlu0 %785
    %789 = vset.pattern.permute.xlu0 0
    %790 = vperm.xlu0 %789, %v720
    %v791 = vpop.permute.xlu0 %790
    %794 = vset.pattern.permute.xlu0 0
    %795 = vperm.xlu0 %794, %v721
    %v796 = vpop.permute.xlu0 %795
    %799 = vset.pattern.permute.xlu0 0
    %800 = vperm.xlu0 %799, %v722
    %v801 = vpop.permute.xlu0 %800
    %804 = vset.pattern.permute.xlu0 0
    %805 = vperm.xlu0 %804, %v723
    %v806 = vpop.permute.xlu0 %805
    %809 = vset.pattern.permute.xlu0 0
    %810 = vperm.xlu0 %809, %v724
    %v811 = vpop.permute.xlu0 %810
    %814 = vset.pattern.permute.xlu0 0
    %815 = vperm.xlu0 %814, %v725
    %v816 = vpop.permute.xlu0 %815
    %819 = vset.pattern.permute.xlu0 0
    %820 = vperm.xlu0 %819, %v726
    %v821 = vpop.permute.xlu0 %820
    %824 = vset.pattern.permute.xlu0 0
    %825 = vperm.xlu0 %824, %v727
    %v826 = vpop.permute.xlu0 %825
    %829 = vset.pattern.permute.xlu0 0
    %830 = vperm.xlu0 %829, %v728
    %v831 = vpop.permute.xlu0 %830
    %834 = vset.pattern.permute.xlu0 0
    %835 = vperm.xlu0 %834, %v729
    %v836 = vpop.permute.xlu0 %835
    %839 = vset.pattern.permute.xlu0 0
    %840 = vperm.xlu0 %839, %v730
    %v841 = vpop.permute.xlu0 %840
    %844 = vset.pattern.permute.xlu0 0
    %845 = vperm.xlu0 %844, %v731
    %v846 = vpop.permute.xlu0 %845
    %849 = vset.pattern.permute.xlu0 0
    %850 = vperm.xlu0 %849, %v732
    %v851 = vpop.permute.xlu0 %850
    %854 = vset.pattern.permute.xlu0 0
    %855 = vperm.xlu0 %854, %v733
    %v856 = vpop.permute.xlu0 %855
    %859 = vset.pattern.permute.xlu0 0
    %860 = vperm.xlu0 %859, %v734
    %v861 = vpop.permute.xlu0 %860
    %864 = vset.pattern.permute.xlu0 0
    %865 = vperm.xlu0 %864, %v735
    %v866 = vpop.permute.xlu0 %865
    %869 = vset.pattern.permute.xlu0 0
    %870 = vperm.xlu0 %869, %v736
    %v871 = vpop.permute.xlu0 %870
    %874 = vset.pattern.permute.xlu0 0
    %875 = vperm.xlu0 %874, %v737
    %v876 = vpop.permute.xlu0 %875
    %879 = vset.pattern.permute.xlu0 0
    %880 = vperm.xlu0 %879, %v738
    %v881 = vpop.permute.xlu0 %880
    %884 = vset.pattern.permute.xlu0 0
    %885 = vperm.xlu0 %884, %v739
    %v886 = vpop.permute.xlu0 %885
    %889 = vset.pattern.permute.xlu0 0
    %890 = vperm.xlu0 %889, %v740
    %v891 = vpop.permute.xlu0 %890
    %894 = vset.pattern.permute.xlu0 0
    %895 = vperm.xlu0 %894, %v741
    %v896 = vpop.permute.xlu0 %895
    %899 = vset.pattern.permute.xlu0 0
    %900 = vperm.xlu0 %899, %v742
    %v901 = vpop.permute.xlu0 %900
    %v935 = vunpack.c.l.b16 %v679
    %v936 = vunpack.c.l.b16 %v680
    %v937 = vunpack.c.l.b16 %v681
    %v938 = vunpack.c.l.b16 %v682
    %v939 = vunpack.c.l.b16 %v683
    %v940 = vunpack.c.l.b16 %v684
    %v941 = vunpack.c.l.b16 %v685
    %v942 = vunpack.c.l.b16 %v686
    %v943 = vunpack.c.l.b16 %v687
    %v944 = vunpack.c.l.b16 %v688
    %v945 = vunpack.c.l.b16 %v689
    %v946 = vunpack.c.l.b16 %v690
    %v947 = vunpack.c.l.b16 %v691
    %v948 = vunpack.c.l.b16 %v692
    %v949 = vunpack.c.l.b16 %v693
    %v950 = vunpack.c.l.b16 %v694
    %v951 = vunpack.c.l.b16 %v695
    %v952 = vunpack.c.l.b16 %v696
    %v953 = vunpack.c.l.b16 %v697
    %v954 = vunpack.c.l.b16 %v698
    %v955 = vunpack.c.l.b16 %v699
    %v956 = vunpack.c.l.b16 %v700
    %v957 = vunpack.c.l.b16 %v701
    %v958 = vunpack.c.l.b16 %v702
    %v959 = vunpack.c.l.b16 %v703
    %v960 = vunpack.c.l.b16 %v704
    %v961 = vunpack.c.l.b16 %v705
    %v962 = vunpack.c.l.b16 %v706
    %v963 = vunpack.c.l.b16 %v707
    %v964 = vunpack.c.l.b16 %v708
    %v965 = vunpack.c.l.b16 %v709
    %v966 = vunpack.c.l.b16 %v710
    %v967 = vpack.c.b16 %v936, %v935
    %v968 = vpack.c.b16 %v938, %v937
    %v969 = vpack.c.b16 %v940, %v939
    %v970 = vpack.c.b16 %v942, %v941
    %v971 = vpack.c.b16 %v944, %v943
    %v972 = vpack.c.b16 %v946, %v945
    %v973 = vpack.c.b16 %v948, %v947
    %v974 = vpack.c.b16 %v950, %v949
    %v975 = vpack.c.b16 %v952, %v951
    %v976 = vpack.c.b16 %v954, %v953
    %v977 = vpack.c.b16 %v956, %v955
    %v978 = vpack.c.b16 %v958, %v957
    %v979 = vpack.c.b16 %v960, %v959
    %v980 = vpack.c.b16 %v962, %v961
    %v981 = vpack.c.b16 %v964, %v963
    %v982 = vpack.c.b16 %v966, %v965
    %999 = vmatprep.subr.bf16.mxu0 %v664
    %1000 = vmatpush1.bf16.msra.mxu0 %v663
    %1001 = vmatprep.subr.bf16.mxu0 %v666
    %1002 = vmatpush1.bf16.msra.mxu0 %v665
    %1003 = vmatprep.subr.bf16.mxu0 %v668
    %1004 = vmatpush1.bf16.msra.mxu0 %v667
    %1005 = vmatprep.subr.bf16.mxu0 %v670
    %1006 = vmatpush1.bf16.msra.mxu0 %v669
    %1007 = vmatprep.subr.bf16.mxu0 %v672
    %1008 = vmatpush1.bf16.msra.mxu0 %v671
    %1009 = vmatprep.subr.bf16.mxu0 %v674
    %1010 = vmatpush1.bf16.msra.mxu0 %v673
    %1011 = vmatprep.subr.bf16.mxu0 %v676
    %1012 = vmatpush1.bf16.msra.mxu0 %v675
    %1013 = vmatprep.subr.bf16.mxu0 %v678
    %1014 = vmatpush1.bf16.msra.mxu0 %v677
    %1015 = vmatprep.subr.bf16.mxu0 0
    %1016 = vmatpush1.bf16.msra.mxu0 0
    %1017 = vmatprep.subr.bf16.mxu0 0
    %1018 = vmatpush1.bf16.msra.mxu0 0
    %1019 = vmatprep.subr.bf16.mxu0 0
    %1020 = vmatpush1.bf16.msra.mxu0 0
    %1021 = vmatprep.subr.bf16.mxu0 0
    %1022 = vmatpush1.bf16.msra.mxu0 0
    %1023 = vmatprep.subr.bf16.mxu0 0
    %1024 = vmatpush1.bf16.msra.mxu0 0
    %1025 = vmatprep.subr.bf16.mxu0 0
    %1026 = vmatpush1.bf16.msra.mxu0 0
    %1027 = vmatprep.subr.bf16.mxu0 0
    %1028 = vmatpush1.bf16.msra.mxu0 0
    %1029 = vmatprep.subr.bf16.mxu0 0
    %1030 = vmatpush1.bf16.msra.mxu0 0
    %1031 = vmatprep.mubr.bf16.mxu0 0
    %1032 = vmatmul.mubr.bf16.gmra.mrb[0].mxu0 %v967
    %v1033 = vpop.f32.mrb[0].mxu0
    %v1034 = vadd.f32 %v746, %v1033
    %v1035 = vpop.f32.mrb[0].mxu0
    %v1036 = vadd.f32 %v746, %v1035
    %v1037 = vpop.f32.mrb[0].mxu0
    %v1038 = vadd.f32 %v751, %v1037
    %v1039 = vpop.f32.mrb[0].mxu0
    %v1040 = vadd.f32 %v751, %v1039
    %1041 = vmatprep.mubr.bf16.mxu0 0
    %1042 = vmatmul.mubr.bf16.gmra.mrb[0].mxu0 %v968
    %v1043 = vpop.f32.mrb[0].mxu0
    %v1044 = vadd.f32 %v756, %v1043
    %v1045 = vpop.f32.mrb[0].mxu0
    %v1046 = vadd.f32 %v756, %v1045
    %v1047 = vpop.f32.mrb[0].mxu0
    %v1048 = vadd.f32 %v761, %v1047
    %v1049 = vpop.f32.mrb[0].mxu0
    %v1050 = vadd.f32 %v761, %v1049
    %1051 = vmatprep.mubr.bf16.mxu0 0
    %1052 = vmatmul.mubr.bf16.gmra.mrb[0].mxu0 %v969
    %v1053 = vpop.f32.mrb[0].mxu0
    %v1054 = vadd.f32 %v766, %v1053
    %v1055 = vpop.f32.mrb[0].mxu0
    %v1056 = vadd.f32 %v766, %v1055
    %v1057 = vpop.f32.mrb[0].mxu0
    %v1058 = vadd.f32 %v771, %v1057
    %v1059 = vpop.f32.mrb[0].mxu0
    %v1060 = vadd.f32 %v771, %v1059
    %1061 = vmatprep.mubr.bf16.mxu0 0
    %1062 = vmatmul.mubr.bf16.gmra.mrb[0].mxu0 %v970
    %v1063 = vpop.f32.mrb[0].mxu0
    %v1064 = vadd.f32 %v776, %v1063
    %v1065 = vpop.f32.mrb[0].mxu0
    %v1066 = vadd.f32 %v776, %v1065
    %v1067 = vpop.f32.mrb[0].mxu0
    %v1068 = vadd.f32 %v781, %v1067
    %v1069 = vpop.f32.mrb[0].mxu0
    %v1070 = vadd.f32 %v781, %v1069
    %1071 = vmatprep.mubr.bf16.mxu0 0
    %1072 = vmatmul.mubr.bf16.gmra.mrb[0].mxu0 %v971
    %v1073 = vpop.f32.mrb[0].mxu0
    %v1074 = vadd.f32 %v786, %v1073
    %v1075 = vpop.f32.mrb[0].mxu0
    %v1076 = vadd.f32 %v786, %v1075
    %v1077 = vpop.f32.mrb[0].mxu0
    %v1078 = vadd.f32 %v791, %v1077
    %v1079 = vpop.f32.mrb[0].mxu0
    %v1080 = vadd.f32 %v791, %v1079
    %1081 = vmatprep.mubr.bf16.mxu0 0
    %1082 = vmatmul.mubr.bf16.gmra.mrb[0].mxu0 %v972
    %v1083 = vpop.f32.mrb[0].mxu0
    %v1084 = vadd.f32 %v796, %v1083
    %v1085 = vpop.f32.mrb[0].mxu0
    %v1086 = vadd.f32 %v796, %v1085
    %v1087 = vpop.f32.mrb[0].mxu0
    %v1088 = vadd.f32 %v801, %v1087
    %v1089 = vpop.f32.mrb[0].mxu0
    %v1090 = vadd.f32 %v801, %v1089
    %1091 = vmatprep.mubr.bf16.mxu0 0
    %1092 = vmatmul.mubr.bf16.gmra.mrb[0].mxu0 %v973
    %v1093 = vpop.f32.mrb[0].mxu0
    %v1094 = vadd.f32 %v806, %v1093
    %v1095 = vpop.f32.mrb[0].mxu0
    %v1096 = vadd.f32 %v806, %v1095
    %v1097 = vpop.f32.mrb[0].mxu0
    %v1098 = vadd.f32 %v811, %v1097
    %v1099 = vpop.f32.mrb[0].mxu0
    %v1100 = vadd.f32 %v811, %v1099
    %1101 = vmatprep.mubr.bf16.mxu0 0
    %1102 = vmatmul.mubr.bf16.gmra.mrb[0].mxu0 %v974
    %v1103 = vpop.f32.mrb[0].mxu0
    %v1104 = vadd.f32 %v816, %v1103
    %v1105 = vpop.f32.mrb[0].mxu0
    %v1106 = vadd.f32 %v816, %v1105
    %v1107 = vpop.f32.mrb[0].mxu0
    %v1108 = vadd.f32 %v821, %v1107
    %v1109 = vpop.f32.mrb[0].mxu0
    %v1110 = vadd.f32 %v821, %v1109
    %1111 = vmatprep.mubr.bf16.mxu0 0
    %1112 = vmatmul.mubr.bf16.gmra.mrb[0].mxu0 %v975
    %v1113 = vpop.f32.mrb[0].mxu0
    %v1114 = vadd.f32 %v826, %v1113
    %v1115 = vpop.f32.mrb[0].mxu0
    %v1116 = vadd.f32 %v826, %v1115
    %v1117 = vpop.f32.mrb[0].mxu0
    %v1118 = vadd.f32 %v831, %v1117
    %v1119 = vpop.f32.mrb[0].mxu0
    %v1120 = vadd.f32 %v831, %v1119
    %1121 = vmatprep.mubr.bf16.mxu0 0
    %1122 = vmatmul.mubr.bf16.gmra.mrb[0].mxu0 %v976
    %v1123 = vpop.f32.mrb[0].mxu0
    %v1124 = vadd.f32 %v836, %v1123
    %v1125 = vpop.f32.mrb[0].mxu0
    %v1126 = vadd.f32 %v836, %v1125
    %v1127 = vpop.f32.mrb[0].mxu0
    %v1128 = vadd.f32 %v841, %v1127
    %v1129 = vpop.f32.mrb[0].mxu0
    %v1130 = vadd.f32 %v841, %v1129
    %1131 = vmatprep.mubr.bf16.mxu0 0
    %1132 = vmatmul.mubr.bf16.gmra.mrb[0].mxu0 %v977
    %v1133 = vpop.f32.mrb[0].mxu0
    %v1134 = vadd.f32 %v846, %v1133
    %v1135 = vpop.f32.mrb[0].mxu0
    %v1136 = vadd.f32 %v846, %v1135
    %v1137 = vpop.f32.mrb[0].mxu0
    %v1138 = vadd.f32 %v851, %v1137
    %v1139 = vpop.f32.mrb[0].mxu0
    %v1140 = vadd.f32 %v851, %v1139
    %1141 = vmatprep.mubr.bf16.mxu0 0
    %1142 = vmatmul.mubr.bf16.gmra.mrb[0].mxu0 %v978
    %v1143 = vpop.f32.mrb[0].mxu0
    %v1144 = vadd.f32 %v856, %v1143
    %v1145 = vpop.f32.mrb[0].mxu0
    %v1146 = vadd.f32 %v856, %v1145
    %v1147 = vpop.f32.mrb[0].mxu0
    %v1148 = vadd.f32 %v861, %v1147
    %v1149 = vpop.f32.mrb[0].mxu0
    %v1150 = vadd.f32 %v861, %v1149
    %1151 = vmatprep.mubr.bf16.mxu0 0
    %1152 = vmatmul.mubr.bf16.gmra.mrb[0].mxu0 %v979
    %v1153 = vpop.f32.mrb[0].mxu0
    %v1154 = vadd.f32 %v866, %v1153
    %v1155 = vpop.f32.mrb[0].mxu0
    %v1156 = vadd.f32 %v866, %v1155
    %v1157 = vpop.f32.mrb[0].mxu0
    %v1158 = vadd.f32 %v871, %v1157
    %v1159 = vpop.f32.mrb[0].mxu0
    %v1160 = vadd.f32 %v871, %v1159
    %1161 = vmatprep.mubr.bf16.mxu0 0
    %1162 = vmatmul.mubr.bf16.gmra.mrb[0].mxu0 %v980
    %v1163 = vpop.f32.mrb[0].mxu0
    %v1164 = vadd.f32 %v876, %v1163
    %v1165 = vpop.f32.mrb[0].mxu0
    %v1166 = vadd.f32 %v876, %v1165
    %v1167 = vpop.f32.mrb[0].mxu0
    %v1168 = vadd.f32 %v881, %v1167
    %v1169 = vpop.f32.mrb[0].mxu0
    %v1170 = vadd.f32 %v881, %v1169
    %1171 = vmatprep.mubr.bf16.mxu0 0
    %1172 = vmatmul.mubr.bf16.gmra.mrb[0].mxu0 %v981
    %v1173 = vpop.f32.mrb[0].mxu0
    %v1174 = vadd.f32 %v886, %v1173
    %v1175 = vpop.f32.mrb[0].mxu0
    %v1176 = vadd.f32 %v886, %v1175
    %v1177 = vpop.f32.mrb[0].mxu0
    %v1178 = vadd.f32 %v891, %v1177
    %v1179 = vpop.f32.mrb[0].mxu0
    %v1180 = vadd.f32 %v891, %v1179
    %1181 = vmatprep.mubr.bf16.mxu0 0
    %1182 = vmatmul.mubr.bf16.gmra.mrb[0].mxu0 %v982
    %v1183 = vpop.f32.mrb[0].mxu0
    %v1184 = vadd.f32 %v896, %v1183
    %v1185 = vpop.f32.mrb[0].mxu0
    %v1186 = vadd.f32 %v896, %v1185
    %v1187 = vpop.f32.mrb[0].mxu0
    %v1188 = vadd.f32 %v901, %v1187
    %v1189 = vpop.f32.mrb[0].mxu0
    %v1190 = vadd.f32 %v901, %v1189
    %1191 = vdwg.mxu0
    %vm1192 = vcmp.gt.f32.partialorder %v1034, 0.0
    %vm1193 = vcmp.gt.f32.partialorder %v1036, 0.0
    %vm1194 = vcmp.gt.f32.partialorder %v1038, 0.0
    %vm1195 = vcmp.gt.f32.partialorder %v1040, 0.0
    %vm1196 = vcmp.gt.f32.partialorder %v1044, 0.0
    %vm1197 = vcmp.gt.f32.partialorder %v1046, 0.0
    %vm1198 = vcmp.gt.f32.partialorder %v1048, 0.0
    %vm1199 = vcmp.gt.f32.partialorder %v1050, 0.0
    %vm1200 = vcmp.gt.f32.partialorder %v1054, 0.0
    %vm1201 = vcmp.gt.f32.partialorder %v1056, 0.0
    %vm1202 = vcmp.gt.f32.partialorder %v1058, 0.0
    %vm1203 = vcmp.gt.f32.partialorder %v1060, 0.0
    %vm1204 = vcmp.gt.f32.partialorder %v1064, 0.0
    %vm1205 = vcmp.gt.f32.partialorder %v1066, 0.0
    %vm1206 = vcmp.gt.f32.partialorder %v1068, 0.0
    %vm1207 = vcmp.gt.f32.partialorder %v1070, 0.0
    %vm1208 = vcmp.gt.f32.partialorder %v1074, 0.0
    %vm1209 = vcmp.gt.f32.partialorder %v1076, 0.0
    %vm1210 = vcmp.gt.f32.partialorder %v1078, 0.0
    %vm1211 = vcmp.gt.f32.partialorder %v1080, 0.0
    %vm1212 = vcmp.gt.f32.partialorder %v1084, 0.0
    %vm1213 = vcmp.gt.f32.partialorder %v1086, 0.0
    %vm1214 = vcmp.gt.f32.partialorder %v1088, 0.0
    %vm1215 = vcmp.gt.f32.partialorder %v1090, 0.0
    %vm1216 = vcmp.gt.f32.partialorder %v1094, 0.0
    %vm1217 = vcmp.gt.f32.partialorder %v1096, 0.0
    %vm1218 = vcmp.gt.f32.partialorder %v1098, 0.0
    %vm1219 = vcmp.gt.f32.partialorder %v1100, 0.0
    %vm1220 = vcmp.gt.f32.partialorder %v1104, 0.0
    %vm1221 = vcmp.gt.f32.partialorder %v1106, 0.0
    %vm1222 = vcmp.gt.f32.partialorder %v1108, 0.0
    %vm1223 = vcmp.gt.f32.partialorder %v1110, 0.0
    %vm1224 = vcmp.gt.f32.partialorder %v1114, 0.0
    %vm1225 = vcmp.gt.f32.partialorder %v1116, 0.0
    %vm1226 = vcmp.gt.f32.partialorder %v1118, 0.0
    %vm1227 = vcmp.gt.f32.partialorder %v1120, 0.0
    %vm1228 = vcmp.gt.f32.partialorder %v1124, 0.0
    %vm1229 = vcmp.gt.f32.partialorder %v1126, 0.0
    %vm1230 = vcmp.gt.f32.partialorder %v1128, 0.0
    %vm1231 = vcmp.gt.f32.partialorder %v1130, 0.0
    %vm1232 = vcmp.gt.f32.partialorder %v1134, 0.0
    %vm1233 = vcmp.gt.f32.partialorder %v1136, 0.0
    %vm1234 = vcmp.gt.f32.partialorder %v1138, 0.0
    %vm1235 = vcmp.gt.f32.partialorder %v1140, 0.0
    %vm1236 = vcmp.gt.f32.partialorder %v1144, 0.0
    %vm1237 = vcmp.gt.f32.partialorder %v1146, 0.0
    %vm1238 = vcmp.gt.f32.partialorder %v1148, 0.0
    %vm1239 = vcmp.gt.f32.partialorder %v1150, 0.0
    %vm1240 = vcmp.gt.f32.partialorder %v1154, 0.0
    %vm1241 = vcmp.gt.f32.partialorder %v1156, 0.0
    %vm1242 = vcmp.gt.f32.partialorder %v1158, 0.0
    %vm1243 = vcmp.gt.f32.partialorder %v1160, 0.0
    %vm1244 = vcmp.gt.f32.partialorder %v1164, 0.0
    %vm1245 = vcmp.gt.f32.partialorder %v1166, 0.0
    %vm1246 = vcmp.gt.f32.partialorder %v1168, 0.0
    %vm1247 = vcmp.gt.f32.partialorder %v1170, 0.0
    %vm1248 = vcmp.gt.f32.partialorder %v1174, 0.0
    %vm1249 = vcmp.gt.f32.partialorder %v1176, 0.0
    %vm1250 = vcmp.gt.f32.partialorder %v1178, 0.0
    %vm1251 = vcmp.gt.f32.partialorder %v1180, 0.0
    %vm1252 = vcmp.gt.f32.partialorder %v1184, 0.0
    %vm1253 = vcmp.gt.f32.partialorder %v1186, 0.0
    %vm1254 = vcmp.gt.f32.partialorder %v1188, 0.0
    %vm1255 = vcmp.gt.f32.partialorder %v1190, 0.0
    %v1256 = vmul.f32 %v1034, 0.2
    %v1257 = vmul.f32 %v1036, 0.2
    %v1258 = vmul.f32 %v1038, 0.2
    %v1259 = vmul.f32 %v1040, 0.2
    %v1260 = vmul.f32 %v1044, 0.2
    %v1261 = vmul.f32 %v1046, 0.2
    %v1262 = vmul.f32 %v1048, 0.2
    %v1263 = vmul.f32 %v1050, 0.2
    %v1264 = vmul.f32 %v1054, 0.2
    %v1265 = vmul.f32 %v1056, 0.2
    %v1266 = vmul.f32 %v1058, 0.2
    %v1267 = vmul.f32 %v1060, 0.2
    %v1268 = vmul.f32 %v1064, 0.2
    %v1269 = vmul.f32 %v1066, 0.2
    %v1270 = vmul.f32 %v1068, 0.2
    %v1271 = vmul.f32 %v1070, 0.2
    %v1272 = vmul.f32 %v1074, 0.2
    %v1273 = vmul.f32 %v1076, 0.2
    %v1274 = vmul.f32 %v1078, 0.2
    %v1275 = vmul.f32 %v1080, 0.2
    %v1276 = vmul.f32 %v1084, 0.2
    %v1277 = vmul.f32 %v1086, 0.2
    %v1278 = vmul.f32 %v1088, 0.2
    %v1279 = vmul.f32 %v1090, 0.2
    %v1280 = vmul.f32 %v1094, 0.2
    %v1281 = vmul.f32 %v1096, 0.2
    %v1282 = vmul.f32 %v1098, 0.2
    %v1283 = vmul.f32 %v1100, 0.2
    %v1284 = vmul.f32 %v1104, 0.2
    %v1285 = vmul.f32 %v1106, 0.2
    %v1286 = vmul.f32 %v1108, 0.2
    %v1287 = vmul.f32 %v1110, 0.2
    %v1288 = vmul.f32 %v1114, 0.2
    %v1289 = vmul.f32 %v1116, 0.2
    %v1290 = vmul.f32 %v1118, 0.2
    %v1291 = vmul.f32 %v1120, 0.2
    %v1292 = vmul.f32 %v1124, 0.2
    %v1293 = vmul.f32 %v1126, 0.2
    %v1294 = vmul.f32 %v1128, 0.2
    %v1295 = vmul.f32 %v1130, 0.2
    %v1296 = vmul.f32 %v1134, 0.2
    %v1297 = vmul.f32 %v1136, 0.2
    %v1298 = vmul.f32 %v1138, 0.2
    %v1299 = vmul.f32 %v1140, 0.2
    %v1300 = vmul.f32 %v1144, 0.2
    %v1301 = vmul.f32 %v1146, 0.2
    %v1302 = vmul.f32 %v1148, 0.2
    %v1303 = vmul.f32 %v1150, 0.2
    %v1304 = vmul.f32 %v1154, 0.2
    %v1305 = vmul.f32 %v1156, 0.2
    %v1306 = vmul.f32 %v1158, 0.2
    %v1307 = vmul.f32 %v1160, 0.2
    %v1308 = vmul.f32 %v1164, 0.2
    %v1309 = vmul.f32 %v1166, 0.2
    %v1310 = vmul.f32 %v1168, 0.2
    %v1311 = vmul.f32 %v1170, 0.2
    %v1312 = vmul.f32 %v1174, 0.2
    %v1313 = vmul.f32 %v1176, 0.2
    %v1314 = vmul.f32 %v1178, 0.2
    %v1315 = vmul.f32 %v1180, 0.2
    %v1316 = vmul.f32 %v1184, 0.2
    %v1317 = vmul.f32 %v1186, 0.2
    %v1318 = vmul.f32 %v1188, 0.2
    %v1319 = vmul.f32 %v1190, 0.2
    %v1320 = vsel %vm1192, %v1034, %v1256
    %v1321 = vsel %vm1193, %v1036, %v1257
    %v1322 = vsel %vm1194, %v1038, %v1258
    %v1323 = vsel %vm1195, %v1040, %v1259
    %v1324 = vsel %vm1196, %v1044, %v1260
    %v1325 = vsel %vm1197, %v1046, %v1261
    %v1326 = vsel %vm1198, %v1048, %v1262
    %v1327 = vsel %vm1199, %v1050, %v1263
    %v1328 = vsel %vm1200, %v1054, %v1264
    %v1329 = vsel %vm1201, %v1056, %v1265
    %v1330 = vsel %vm1202, %v1058, %v1266
    %v1331 = vsel %vm1203, %v1060, %v1267
    %v1332 = vsel %vm1204, %v1064, %v1268
    %v1333 = vsel %vm1205, %v1066, %v1269
    %v1334 = vsel %vm1206, %v1068, %v1270
    %v1335 = vsel %vm1207, %v1070, %v1271
    %v1336 = vsel %vm1208, %v1074, %v1272
    %v1337 = vsel %vm1209, %v1076, %v1273
    %v1338 = vsel %vm1210, %v1078, %v1274
    %v1339 = vsel %vm1211, %v1080, %v1275
    %v1340 = vsel %vm1212, %v1084, %v1276
    %v1341 = vsel %vm1213, %v1086, %v1277
    %v1342 = vsel %vm1214, %v1088, %v1278
    %v1343 = vsel %vm1215, %v1090, %v1279
    %v1344 = vsel %vm1216, %v1094, %v1280
    %v1345 = vsel %vm1217, %v1096, %v1281
    %v1346 = vsel %vm1218, %v1098, %v1282
    %v1347 = vsel %vm1219, %v1100, %v1283
    %v1348 = vsel %vm1220, %v1104, %v1284
    %v1349 = vsel %vm1221, %v1106, %v1285
    %v1350 = vsel %vm1222, %v1108, %v1286
    %v1351 = vsel %vm1223, %v1110, %v1287
    %v1352 = vsel %vm1224, %v1114, %v1288
    %v1353 = vsel %vm1225, %v1116, %v1289
    %v1354 = vsel %vm1226, %v1118, %v1290
    %v1355 = vsel %vm1227, %v1120, %v1291
    %v1356 = vsel %vm1228, %v1124, %v1292
    %v1357 = vsel %vm1229, %v1126, %v1293
    %v1358 = vsel %vm1230, %v1128, %v1294
    %v1359 = vsel %vm1231, %v1130, %v1295
    %v1360 = vsel %vm1232, %v1134, %v1296
    %v1361 = vsel %vm1233, %v1136, %v1297
    %v1362 = vsel %vm1234, %v1138, %v1298
    %v1363 = vsel %vm1235, %v1140, %v1299
    %v1364 = vsel %vm1236, %v1144, %v1300
    %v1365 = vsel %vm1237, %v1146, %v1301
    %v1366 = vsel %vm1238, %v1148, %v1302
    %v1367 = vsel %vm1239, %v1150, %v1303
    %v1368 = vsel %vm1240, %v1154, %v1304
    %v1369 = vsel %vm1241, %v1156, %v1305
    %v1370 = vsel %vm1242, %v1158, %v1306
    %v1371 = vsel %vm1243, %v1160, %v1307
    %v1372 = vsel %vm1244, %v1164, %v1308
    %v1373 = vsel %vm1245, %v1166, %v1309
    %v1374 = vsel %vm1246, %v1168, %v1310
    %v1375 = vsel %vm1247, %v1170, %v1311
    %v1376 = vsel %vm1248, %v1174, %v1312
    %v1377 = vsel %vm1249, %v1176, %v1313
    %v1378 = vsel %vm1250, %v1178, %v1314
    %v1379 = vsel %vm1251, %v1180, %v1315
    %v1380 = vsel %vm1252, %v1184, %v1316
    %v1381 = vsel %vm1253, %v1186, %v1317
    %v1382 = vsel %vm1254, %v1188, %v1318
    %v1383 = vsel %vm1255, %v1190, %v1319
    %v1384 = vpack.c.bf16 %v1322, %v1320
    %v1385 = vpack.c.bf16 %v1323, %v1321
    %v1386 = vpack.c.bf16 %v1326, %v1324
    %v1387 = vpack.c.bf16 %v1327, %v1325
    %v1388 = vpack.c.bf16 %v1330, %v1328
    %v1389 = vpack.c.bf16 %v1331, %v1329
    %v1390 = vpack.c.bf16 %v1334, %v1332
    %v1391 = vpack.c.bf16 %v1335, %v1333
    %v1392 = vpack.c.bf16 %v1338, %v1336
    %v1393 = vpack.c.bf16 %v1339, %v1337
    %v1394 = vpack.c.bf16 %v1342, %v1340
    %v1395 = vpack.c.bf16 %v1343, %v1341
    %v1396 = vpack.c.bf16 %v1346, %v1344
    %v1397 = vpack.c.bf16 %v1347, %v1345
    %v1398 = vpack.c.bf16 %v1350, %v1348
    %v1399 = vpack.c.bf16 %v1351, %v1349
    %v1400 = vpack.c.bf16 %v1354, %v1352
    %v1401 = vpack.c.bf16 %v1355, %v1353
    %v1402 = vpack.c.bf16 %v1358, %v1356
    %v1403 = vpack.c.bf16 %v1359, %v1357
    %v1404 = vpack.c.bf16 %v1362, %v1360
    %v1405 = vpack.c.bf16 %v1363, %v1361
    %v1406 = vpack.c.bf16 %v1366, %v1364
    %v1407 = vpack.c.bf16 %v1367, %v1365
    %v1408 = vpack.c.bf16 %v1370, %v1368
    %v1409 = vpack.c.bf16 %v1371, %v1369
    %v1410 = vpack.c.bf16 %v1374, %v1372
    %v1411 = vpack.c.bf16 %v1375, %v1373
    %v1412 = vpack.c.bf16 %v1378, %v1376
    %v1413 = vpack.c.bf16 %v1379, %v1377
    %v1414 = vpack.c.bf16 %v1382, %v1380
    %v1415 = vpack.c.bf16 %v1383, %v1381
    %v1416 = vld [vmem:[%s7] sm:$0x3]
    %s1417 = sld [smem:[#allocation2]]
    %v1418 = vstv %s1417
    %v1421 = vunpack.c.l.s4 1966171168
    %v1422 = vunpack.c.0.s8 %v1421
    %v1423 = vlaneseq
    %v1424 = vshrl.u32 %v1423, 7
    %v1425 = vsub.s32 %v1422, %v1424
    %v1426 = vrot.slane %v1416, %v1425
    %v1427 = vcombine.high %v1426, %v1426
    %v1429 = vunpack.c.l.s4 1966171168
    %v1430 = vunpack.c.0.s8 %v1429
    %v1431 = vlaneseq
    %v1432 = vshrl.u32 %v1431, 7
    %v1433 = vsub.s32 %v1430, %v1432
    %v1434 = vrot.slane %v1426, %v1433
    %v1436 = vunpack.c.l.s4 1966171168
    %v1437 = vunpack.c.0.s8 %v1436
    %v1438 = vlaneseq
    %v1439 = vshrl.u32 %v1438, 7
    %v1440 = vsub.s32 %v1437, %v1439
    %v1441 = vrot.slane %v1427, %v1440
    %1444 = vmatprep.subr.bf16.mxu0 %v1385
    %1445 = vmatpush1.bf16.msra.mxu0 %v1384
    %1446 = vmatprep.subr.bf16.mxu0 %v1387
    %1447 = vmatpush1.bf16.msra.mxu0 %v1386
    %1448 = vmatprep.subr.bf16.mxu0 %v1389
    %1449 = vmatpush1.bf16.msra.mxu0 %v1388
    %1450 = vmatprep.subr.bf16.mxu0 %v1391
    %1451 = vmatpush1.bf16.msra.mxu0 %v1390
    %1452 = vmatprep.subr.bf16.mxu0 %v1393
    %1453 = vmatpush1.bf16.msra.mxu0 %v1392
    %1454 = vmatprep.subr.bf16.mxu0 %v1395
    %1455 = vmatpush1.bf16.msra.mxu0 %v1394
    %1456 = vmatprep.subr.bf16.mxu0 %v1397
    %1457 = vmatpush1.bf16.msra.mxu0 %v1396
    %1458 = vmatprep.subr.bf16.mxu0 %v1399
    %1459 = vmatpush1.bf16.msra.mxu0 %v1398
    %1460 = vmatprep.subr.bf16.mxu0 %v1401
    %1461 = vmatpush1.bf16.msra.mxu0 %v1400
    %1462 = vmatprep.subr.bf16.mxu0 %v1403
    %1463 = vmatpush1.bf16.msra.mxu0 %v1402
    %1464 = vmatprep.subr.bf16.mxu0 %v1405
    %1465 = vmatpush1.bf16.msra.mxu0 %v1404
    %1466 = vmatprep.subr.bf16.mxu0 %v1407
    %1467 = vmatpush1.bf16.msra.mxu0 %v1406
    %1468 = vmatprep.subr.bf16.mxu0 %v1409
    %1469 = vmatpush1.bf16.msra.mxu0 %v1408
    %1470 = vmatprep.subr.bf16.mxu0 %v1411
    %1471 = vmatpush1.bf16.msra.mxu0 %v1410
    %1472 = vmatprep.subr.bf16.mxu0 %v1413
    %1473 = vmatpush1.bf16.msra.mxu0 %v1412
    %1474 = vmatprep.subr.bf16.mxu0 %v1415
    %1475 = vmatpush1.bf16.msra.mxu0 %v1414
    %1476 = vmatprep.mubr.bf16.mxu0 %v1441
    %1477 = vmatmul.mubr.bf16.gmra.mrb[0].mxu0 %v1434
    %v1478 = vpop.f32.mrb[0].mxu0
    %v1479 = vadd.f32 %v1418, %v1478
    %v1480 = vpop.f32.mrb[0].mxu0
    %v1481 = vadd.f32 %v1418, %v1480
    %v1482 = vpop.f32.mrb[0].mxu0
    %v1483 = vpop.f32.mrb[0].mxu0
    %1484 = vdwg.mxu0
    %v1485 = vxor.u32 %v1479, 2147483648
    %v1486 = vxor.u32 %v1481, 2147483648
    %v1487 = vmul.f32 %v1485, 1.442695
    %v1488 = vpow.pop %v1487
    %v1489 = vmul.f32 %v1486, 1.442695
    %v1490 = vpow.pop %v1489
    %v1491 = vadd.f32 %v1488, 1.0
    %v1492 = vadd.f32 %v1490, 1.0
    %v1493 = vrcp.pop %v1491
    %v1494 = vmul.f32 1.0, %v1493
    %v1495 = vrcp.pop %v1492
    %v1496 = vmul.f32 1.0, %v1495
    %v1499 = vcombine.low %v1494, %v1496
    %v1501 = vunpack.c.l.s4 1966171168
    %v1502 = vunpack.c.0.s8 %v1501
    %v1503 = vlaneseq
    %v1504 = vshrl.u32 %v1503, 7
    %v1505 = vsub.s32 %v1502, %v1504
    %v1506 = vrot.slane %v1499, %v1505
    %v1508 = vunpack.c.l.s4 1966171168
    %v1509 = vunpack.c.0.s8 %v1508
    %v1510 = vlaneseq
    %v1511 = vshrl.u32 %v1510, 7
    %v1512 = vsub.s32 %v1509, %v1511
    %v1513 = vrot.slane %v1506, %v1512
    %v1515 = vlaneseq
    %vm1516 = vcmp.ge.s32.totalorder %v1515, 0
    %vm1517 = vcmp.lt.s32.totalorder %v1515, 256
    %vm1518 = vmand %vm1516, %vm1517
    %1519 = vst.msk [vmem:[#allocation3] sm:$0x3] %vm1518, %v1513
    // Predicated region
    $region38: #{tpu_custom_call.1} parent=1 // pred_check
      _
    $region39: #{tpu_custom_call.1} parent=1 // pred_check_branch
      %1521 = sbr.rel (0) target = $region41
    $region40: #{tpu_custom_call.1} parent=1 // pred_region
      %s1523 = ssub.s32 32, 32
      %1524 = vsyncadd [#allocation4], %s1523
      %s1526 = sshll.u32 [#allocation3], 4
      %s1527 = int_to_ptr.vmem [resolvable:$true] %s1526
      %1529 = dma.vmem_to_hbm [thread:$0]  %s1527, 32, %s9, [#allocation4]
    $region41: #{tpu_custom_call.1} parent=1 // pred_fallthru
      _
    // Predicated region
    $region42: #{tpu_custom_call.1} parent=1 // pred_check
      _
    $region43: #{tpu_custom_call.1} parent=1 // pred_check_branch
      %1531 = sbr.rel (0) target = $region45
    $region44: #{tpu_custom_call.1} parent=1 // pred_region
      %1532 = dma.done [#allocation4], 32
    $region45: #{tpu_custom_call.1} parent=1 // pred_fallthru
      _
    %1533 = vsyncpa [#allocation4], 1

</llo_original>
